<compile_context>
chip_gen: v7x
topology: tpu7x:2x2x1
jax: 0.10.0
libtpu: 0.0.40
codegen_flags: <defaults>
</compile_context>

<pallas_src>
import jax
import jax.numpy as jnp
from jax import lax
from jax.experimental import pallas as pl
from jax.experimental.pallas import tpu as pltpu


def _round_up(x, m):
    return (x + m - 1) // m * m


def _log_sigmoid(x):
    # Numerically stable log(sigmoid(x)) = min(x, 0) - log1p(exp(-|x|))
    return jnp.minimum(x, 0.0) - jnp.log1p(jnp.exp(-jnp.abs(x)))


def skipgram_fused_kernel(center_ref, ctx_ref, in_tab_t_ref, out_tab_ref,
                          out_ref):
    # center_ref   : (1, TB)  int32   -- center word id per row (batch on lanes)
    # ctx_ref      : (C, TB)  int32   -- pos+neg context ids per row
    # in_tab_t_ref : (D, V)   f32     -- in_embedding.T   (resident in VMEM)
    # out_tab_ref  : (V, D)   f32     -- out_embedding    (resident in VMEM)
    # out_ref      : (1, TB)  f32     -- per-row loss
    f32 = jnp.float32
    V = out_tab_ref.shape[0]
    C = ctx_ref.shape[0]
    TB = center_ref.shape[1]

    # Hoisted once (JAX does not CSE broadcast_in_dim).
    vocab_iota = lax.broadcasted_iota(jnp.int32, (V, TB), 0)

    # One-hot gather of each row's center embedding on the MXU (exact):
    #   in_e[d, b] = in_table[center[b], d]
    center_oh = (center_ref[...] == vocab_iota).astype(f32)            # (V, TB)
    in_e = jnp.dot(in_tab_t_ref[...], center_oh,
                   preferred_element_type=f32,
                   precision=lax.Precision.HIGHEST)                     # (D, TB)

    # Scores of every vocab word against each row's center embedding:
    #   s_all[v, b] = <out_table[v, :], in_e[:, b]>
    s_all = jnp.dot(out_tab_ref[...], in_e,
                    preferred_element_type=f32,
                    precision=lax.Precision.HIGHEST)                    # (V, TB)

    ls_all = _log_sigmoid(s_all)                                        # (V, TB)

    # counts[v, b] = multiplicity of vocab id v among row b's C context ids.
    # Static loop (C = P + N is small); handles duplicate context ids exactly.
    counts = jnp.zeros((V, TB), f32)
    for c in range(C):
        counts = counts + (ctx_ref[c:c + 1, :] == vocab_iota).astype(f32)

    # loss[b] = -sum_c logsigmoid(score[b, c]) = -sum_v counts[v,b] * ls_all[v,b]
    # Sublane reduction lands directly as a lane-dense (1, TB) row.
    out_ref[...] = -jnp.sum(counts * ls_all, axis=0, keepdims=True)


def _pick_tile(B, V, max_tile=2048):
    """Batch tile size: VMEM-budgeted, lane-aligned, >=2 balanced tiles for
    large B so v7x's two TensorCores both get work."""
    # Keep the (V, TB) f32 intermediates (one-hot, scores, counts) ~<= 2 MiB.
    cap = (1 << 19) // max(V, 1)
    cap = max(128, min(max_tile, cap // 128 * 128))
    if B < 512:
        return B            # single full-dim tile (blocks == full array dims)
    tb = min(cap, _round_up(-(-B // 2), 128))   # aim for >= 2 balanced tiles
    return max(tb, 128)


def skipgram_forward_pallas(center, ctx_idx, in_table, out_table):
    """center: (B,) int, ctx_idx: (B, C) int, tables: (V, D) f32 -> (B,) f32."""
    B = center.shape[0]
    C = ctx_idx.shape[1]
    V, D = in_table.shape

    TB = _pick_tile(B, V)
    B_pad = _round_up(B, TB)
    n_tiles = B_pad // TB

    # Index streams, batch on the lane axis (lane-dense int32 blocks).
    center2 = center.reshape(1, B).astype(jnp.int32)        # (1, B)
    ctx_t = ctx_idx.T.astype(jnp.int32)                     # (C, B)
    if B_pad != B:
        # Only the tiny int32 index arrays are padded (review item 3);
        # padded rows compute a finite dummy loss and are sliced off below.
        center2 = jnp.pad(center2, ((0, 0), (0, B_pad - B)))
        ctx_t = jnp.pad(ctx_t, ((0, 0), (0, B_pad - B)))

    in_table_t = in_table.T                                  # (D, V), tiny

    out = pl.pallas_call(
        skipgram_fused_kernel,
        out_shape=jax.ShapeDtypeStruct((1, B_pad), jnp.float32),
        grid_spec=pltpu.PrefetchScalarGridSpec(
            num_scalar_prefetch=0,
            grid=(n_tiles,),
            in_specs=[
                pl.BlockSpec((1, TB), lambda i: (0, i)),     # center ids
                pl.BlockSpec((C, TB), lambda i: (0, i)),     # context ids
                pl.BlockSpec((D, V), lambda i: (0, 0)),      # in_table.T (resident)
                pl.BlockSpec((V, D), lambda i: (0, 0)),      # out_table  (resident)
            ],
            out_specs=pl.BlockSpec((1, TB), lambda i: (0, i)),
        ),
        compiler_params=pltpu.CompilerParams(
            dimension_semantics=("parallel",)),
    )(center2, ctx_t, in_table_t, out_table)

    return out[0, :B]


class SkipGramPallas:
    def __init__(self, vocab_size, embedding_dim, key):
        self.vocab_size = vocab_size
        self.embedding_dim = embedding_dim
        k_in, k_out = jax.random.split(key)
        # nn.Embedding default init: N(0, 1).  (Tables kept in f32 to match the
        # PyTorch module; bf16 storage would halve HBM bytes if ever needed.)
        self.in_embedding = jax.random.normal(
            k_in, (vocab_size, embedding_dim), dtype=jnp.float32)
        self.out_embedding = jax.random.normal(
            k_out, (vocab_size, embedding_dim), dtype=jnp.float32)

    def __call__(self, center, pos_words, neg_words):
        ctx_idx = jnp.concatenate([pos_words, neg_words], axis=1)   # (B, C)
        V, D = self.in_embedding.shape
        tables_fit_vmem = (V <= 2048) and (2 * V * max(D, 128) * 4 <= (4 << 20))
        if tables_fit_vmem:
            return skipgram_forward_pallas(
                center, ctx_idx, self.in_embedding, self.out_embedding)
        # TODO(synk): large-vocab path — keep the tables in memory_space=pl.ANY
        # and gather rows with double-buffered per-row make_async_copy inside
        # the kernel instead of this JAX fallback.
        in_emb = jnp.take(self.in_embedding, center, axis=0)
        ctx_emb = jnp.take(self.out_embedding, ctx_idx, axis=0)
        scores = jnp.einsum('bcd,bd->bc', ctx_emb, in_emb,
                            precision=lax.Precision.HIGHEST)
        return -jnp.sum(_log_sigmoid(scores), axis=-1)


def reference_forward(model, center, pos_words, neg_words):
    in_emb = jnp.take(model.in_embedding, center, axis=0)
    pos_emb = jnp.take(model.out_embedding, pos_words, axis=0)
    neg_emb = jnp.take(model.out_embedding, neg_words, axis=0)
    pos_score = jnp.einsum('bpd,bd->bp', pos_emb, in_emb,
                           precision=lax.Precision.HIGHEST)
    neg_score = jnp.einsum('bnd,bd->bn', neg_emb, in_emb,
                           precision=lax.Precision.HIGHEST)
    pos_loss = jnp.sum(jax.nn.log_sigmoid(pos_score), axis=1)
    neg_loss = jnp.sum(jax.nn.log_sigmoid(neg_score), axis=1)
    return -(pos_loss + neg_loss)


if __name__ == "__main__":
    key = jax.random.PRNGKey(0)
    k_model, k_c, k_p, k_n, k_c2, k_p2, k_n2 = jax.random.split(key, 7)

    vocab_size = 64
    embedding_dim = 32
    num_pos = 4
    num_neg = 8

    model = SkipGramPallas(vocab_size, embedding_dim, k_model)

    # --- small case (matches the original demo shapes): single full-dim tile ---
    batch = 2
    center = jax.random.randint(k_c, (batch,), 0, vocab_size, dtype=jnp.int32)
    pos_words = jax.random.randint(k_p, (batch, num_pos), 0, vocab_size,
                                   dtype=jnp.int32)
    neg_words = jax.random.randint(k_n, (batch, num_neg), 0, vocab_size,
                                   dtype=jnp.int32)

    loss = jax.block_until_ready(model(center, pos_words, neg_words))
    ref = jax.block_until_ready(
        reference_forward(model, center, pos_words, neg_words))
    assert loss.shape == (batch,)
    assert jnp.allclose(loss, ref, atol=1e-3, rtol=1e-3), (loss, ref)

    # --- larger case: two balanced 1280-row tiles (parallel grid, no padding) ---
    batch2 = 2560
    center2 = jax.random.randint(k_c2, (batch2,), 0, vocab_size,
                                 dtype=jnp.int32)
    pos_words2 = jax.random.randint(k_p2, (batch2, num_pos), 0, vocab_size,
                                    dtype=jnp.int32)
    neg_words2 = jax.random.randint(k_n2, (batch2, num_neg), 0, vocab_size,
                                    dtype=jnp.int32)

    loss2 = jax.block_until_ready(model(center2, pos_words2, neg_words2))
    ref2 = jax.block_until_ready(
        reference_forward(model, center2, pos_words2, neg_words2))
    assert loss2.shape == (batch2,)
    assert jnp.allclose(loss2, ref2, atol=1e-3, rtol=1e-3)

    print("KERNEL_OK")
</pallas_src>

<mosaic_0001>
module attributes {stable_mosaic.version = 11 : i64} {
  func.func @skipgram_fused_kernel(%arg0: i32, %arg1: memref<1x2xi32, #tpu.memory_space<vmem>>, %arg2: memref<12x2xi32, #tpu.memory_space<vmem>>, %arg3: memref<32x64xf32, #tpu.memory_space<vmem>>, %arg4: memref<64x32xf32, #tpu.memory_space<vmem>>, %arg5: memref<1x2xf32, #tpu.memory_space<vmem>>) attributes {dimension_semantics = [#tpu.dimension_semantics<parallel>], iteration_bounds = array<i64: 1>, scalar_prefetch = 0 : i64, scratch_operands = 0 : i64, tpu.core_type = #tpu.core_type<tc>, window_params = [{transform_indices = @transform_0, window_bounds = array<i64: 1, 2>}, {transform_indices = @transform_1, window_bounds = array<i64: 12, 2>}, {pipeline_mode = #tpu.pipeline_mode<synchronous>, transform_indices = @transform_2, window_bounds = array<i64: 32, 64>}, {pipeline_mode = #tpu.pipeline_mode<synchronous>, transform_indices = @transform_3, window_bounds = array<i64: 64, 32>}, {transform_indices = @transform_4, window_bounds = array<i64: 1, 2>}]} {
    %0 = tpu.iota {dimensions = array<i32: 0>} : vector<64x2xi32>
    %c0 = arith.constant 0 : index
    %c0_0 = arith.constant 0 : index
    %1 = vector.load %arg1[%c0, %c0_0] : memref<1x2xi32, #tpu.memory_space<vmem>>, vector<1x2xi32>
    %2 = vector.broadcast %1 : vector<1x2xi32> to vector<64x2xi32>
    %3 = arith.cmpi eq, %2, %0 : vector<64x2xi32>
    %4 = arith.extui %3 : vector<64x2xi1> to vector<64x2xi32>
    %5 = arith.sitofp %4 : vector<64x2xi32> to vector<64x2xf32>
    %c0_1 = arith.constant 0 : index
    %c0_2 = arith.constant 0 : index
    %6 = vector.load %arg3[%c0_1, %c0_2] : memref<32x64xf32, #tpu.memory_space<vmem>>, vector<32x64xf32>
    %cst = arith.constant dense<0.000000e+00> : vector<32x2xf32>
    %7 = tpu.matmul %6, %5, %cst {dimension_numbers = #tpu.dot_dimension_numbers<[1], [0], [0], [1], [0, 0, 1, 1], [], []>, precision = #tpu.contract_precision<fp32>} : vector<32x64xf32>, vector<64x2xf32>, vector<32x2xf32> -> vector<32x2xf32>
    %c0_3 = arith.constant 0 : index
    %c0_4 = arith.constant 0 : index
    %8 = vector.load %arg4[%c0_3, %c0_4] : memref<64x32xf32, #tpu.memory_space<vmem>>, vector<64x32xf32>
    %cst_5 = arith.constant dense<0.000000e+00> : vector<64x2xf32>
    %9 = tpu.matmul %8, %7, %cst_5 {dimension_numbers = #tpu.dot_dimension_numbers<[1], [0], [0], [1], [0, 0, 1, 1], [], []>, precision = #tpu.contract_precision<fp32>} : vector<64x32xf32>, vector<32x2xf32>, vector<64x2xf32> -> vector<64x2xf32>
    %cst_6 = arith.constant 0.000000e+00 : f32
    %10 = vector.broadcast %cst_6 : f32 to vector<64x2xf32>
    %11 = arith.minimumf %9, %10 : vector<64x2xf32>
    %12 = math.absf %9 : vector<64x2xf32>
    %cst_7 = arith.constant 0.000000e+00 : f32
    %13 = vector.broadcast %cst_7 : f32 to vector<64x2xf32>
    %14 = arith.subf %13, %12 : vector<64x2xf32>
    %15 = math.exp %14 : vector<64x2xf32>
    %16 = math.log1p %15 : vector<64x2xf32>
    %17 = arith.subf %11, %16 : vector<64x2xf32>
    %cst_8 = arith.constant 0.000000e+00 : f32
    %18 = vector.broadcast %cst_8 : f32 to vector<64x2xf32>
    %c0_9 = arith.constant 0 : index
    %c0_10 = arith.constant 0 : index
    %19 = vector.load %arg2[%c0_9, %c0_10] : memref<12x2xi32, #tpu.memory_space<vmem>>, vector<1x2xi32>
    %20 = vector.broadcast %19 : vector<1x2xi32> to vector<64x2xi32>
    %21 = arith.cmpi eq, %20, %0 : vector<64x2xi32>
    %22 = arith.extui %21 : vector<64x2xi1> to vector<64x2xi32>
    %23 = arith.sitofp %22 : vector<64x2xi32> to vector<64x2xf32>
    %24 = arith.addf %18, %23 : vector<64x2xf32>
    %c1 = arith.constant 1 : index
    %c0_11 = arith.constant 0 : index
    %25 = vector.load %arg2[%c1, %c0_11] : memref<12x2xi32, #tpu.memory_space<vmem>>, vector<1x2xi32>
    %26 = vector.broadcast %25 : vector<1x2xi32> to vector<64x2xi32>
    %27 = arith.cmpi eq, %26, %0 : vector<64x2xi32>
    %28 = arith.extui %27 : vector<64x2xi1> to vector<64x2xi32>
    %29 = arith.sitofp %28 : vector<64x2xi32> to vector<64x2xf32>
    %30 = arith.addf %24, %29 : vector<64x2xf32>
    %c2 = arith.constant 2 : index
    %c0_12 = arith.constant 0 : index
    %31 = vector.load %arg2[%c2, %c0_12] : memref<12x2xi32, #tpu.memory_space<vmem>>, vector<1x2xi32>
    %32 = vector.broadcast %31 : vector<1x2xi32> to vector<64x2xi32>
    %33 = arith.cmpi eq, %32, %0 : vector<64x2xi32>
    %34 = arith.extui %33 : vector<64x2xi1> to vector<64x2xi32>
    %35 = arith.sitofp %34 : vector<64x2xi32> to vector<64x2xf32>
    %36 = arith.addf %30, %35 : vector<64x2xf32>
    %c3 = arith.constant 3 : index
    %c0_13 = arith.constant 0 : index
    %37 = vector.load %arg2[%c3, %c0_13] : memref<12x2xi32, #tpu.memory_space<vmem>>, vector<1x2xi32>
    %38 = vector.broadcast %37 : vector<1x2xi32> to vector<64x2xi32>
    %39 = arith.cmpi eq, %38, %0 : vector<64x2xi32>
    %40 = arith.extui %39 : vector<64x2xi1> to vector<64x2xi32>
    %41 = arith.sitofp %40 : vector<64x2xi32> to vector<64x2xf32>
    %42 = arith.addf %36, %41 : vector<64x2xf32>
    %c4 = arith.constant 4 : index
    %c0_14 = arith.constant 0 : index
    %43 = vector.load %arg2[%c4, %c0_14] : memref<12x2xi32, #tpu.memory_space<vmem>>, vector<1x2xi32>
    %44 = vector.broadcast %43 : vector<1x2xi32> to vector<64x2xi32>
    %45 = arith.cmpi eq, %44, %0 : vector<64x2xi32>
    %46 = arith.extui %45 : vector<64x2xi1> to vector<64x2xi32>
    %47 = arith.sitofp %46 : vector<64x2xi32> to vector<64x2xf32>
    %48 = arith.addf %42, %47 : vector<64x2xf32>
    %c5 = arith.constant 5 : index
    %c0_15 = arith.constant 0 : index
    %49 = vector.load %arg2[%c5, %c0_15] : memref<12x2xi32, #tpu.memory_space<vmem>>, vector<1x2xi32>
    %50 = vector.broadcast %49 : vector<1x2xi32> to vector<64x2xi32>
    %51 = arith.cmpi eq, %50, %0 : vector<64x2xi32>
    %52 = arith.extui %51 : vector<64x2xi1> to vector<64x2xi32>
    %53 = arith.sitofp %52 : vector<64x2xi32> to vector<64x2xf32>
    %54 = arith.addf %48, %53 : vector<64x2xf32>
    %c6 = arith.constant 6 : index
    %c0_16 = arith.constant 0 : index
    %55 = vector.load %arg2[%c6, %c0_16] : memref<12x2xi32, #tpu.memory_space<vmem>>, vector<1x2xi32>
    %56 = vector.broadcast %55 : vector<1x2xi32> to vector<64x2xi32>
    %57 = arith.cmpi eq, %56, %0 : vector<64x2xi32>
    %58 = arith.extui %57 : vector<64x2xi1> to vector<64x2xi32>
    %59 = arith.sitofp %58 : vector<64x2xi32> to vector<64x2xf32>
    %60 = arith.addf %54, %59 : vector<64x2xf32>
    %c7 = arith.constant 7 : index
    %c0_17 = arith.constant 0 : index
    %61 = vector.load %arg2[%c7, %c0_17] : memref<12x2xi32, #tpu.memory_space<vmem>>, vector<1x2xi32>
    %62 = vector.broadcast %61 : vector<1x2xi32> to vector<64x2xi32>
    %63 = arith.cmpi eq, %62, %0 : vector<64x2xi32>
    %64 = arith.extui %63 : vector<64x2xi1> to vector<64x2xi32>
    %65 = arith.sitofp %64 : vector<64x2xi32> to vector<64x2xf32>
    %66 = arith.addf %60, %65 : vector<64x2xf32>
    %c8 = arith.constant 8 : index
    %c0_18 = arith.constant 0 : index
    %67 = vector.load %arg2[%c8, %c0_18] : memref<12x2xi32, #tpu.memory_space<vmem>>, vector<1x2xi32>
    %68 = vector.broadcast %67 : vector<1x2xi32> to vector<64x2xi32>
    %69 = arith.cmpi eq, %68, %0 : vector<64x2xi32>
    %70 = arith.extui %69 : vector<64x2xi1> to vector<64x2xi32>
    %71 = arith.sitofp %70 : vector<64x2xi32> to vector<64x2xf32>
    %72 = arith.addf %66, %71 : vector<64x2xf32>
    %c9 = arith.constant 9 : index
    %c0_19 = arith.constant 0 : index
    %73 = vector.load %arg2[%c9, %c0_19] : memref<12x2xi32, #tpu.memory_space<vmem>>, vector<1x2xi32>
    %74 = vector.broadcast %73 : vector<1x2xi32> to vector<64x2xi32>
    %75 = arith.cmpi eq, %74, %0 : vector<64x2xi32>
    %76 = arith.extui %75 : vector<64x2xi1> to vector<64x2xi32>
    %77 = arith.sitofp %76 : vector<64x2xi32> to vector<64x2xf32>
    %78 = arith.addf %72, %77 : vector<64x2xf32>
    %c10 = arith.constant 10 : index
    %c0_20 = arith.constant 0 : index
    %79 = vector.load %arg2[%c10, %c0_20] : memref<12x2xi32, #tpu.memory_space<vmem>>, vector<1x2xi32>
    %80 = vector.broadcast %79 : vector<1x2xi32> to vector<64x2xi32>
    %81 = arith.cmpi eq, %80, %0 : vector<64x2xi32>
    %82 = arith.extui %81 : vector<64x2xi1> to vector<64x2xi32>
    %83 = arith.sitofp %82 : vector<64x2xi32> to vector<64x2xf32>
    %84 = arith.addf %78, %83 : vector<64x2xf32>
    %c11 = arith.constant 11 : index
    %c0_21 = arith.constant 0 : index
    %85 = vector.load %arg2[%c11, %c0_21] : memref<12x2xi32, #tpu.memory_space<vmem>>, vector<1x2xi32>
    %86 = vector.broadcast %85 : vector<1x2xi32> to vector<64x2xi32>
    %87 = arith.cmpi eq, %86, %0 : vector<64x2xi32>
    %88 = arith.extui %87 : vector<64x2xi1> to vector<64x2xi32>
    %89 = arith.sitofp %88 : vector<64x2xi32> to vector<64x2xf32>
    %90 = arith.addf %84, %89 : vector<64x2xf32>
    %91 = arith.mulf %90, %17 : vector<64x2xf32>
    %cst_22 = arith.constant dense<0.000000e+00> : vector<2xf32>
    %92 = vector.multi_reduction <add>, %91, %cst_22 [0] : vector<64x2xf32> to vector<2xf32>
    %93 = vector.shape_cast %92 : vector<2xf32> to vector<1x2xf32>
    %cst_23 = arith.constant 0.000000e+00 : f32
    %94 = vector.broadcast %cst_23 : f32 to vector<1x2xf32>
    %95 = arith.subf %94, %93 : vector<1x2xf32>
    %c0_24 = arith.constant 0 : index
    %c0_25 = arith.constant 0 : index
    %96 = vector.load %arg5[%c0_24, %c0_25] : memref<1x2xf32, #tpu.memory_space<vmem>>, vector<1x2xf32>
    tpu.vector_store %arg5[%c0_24, %c0_25], %95 {strides = array<i32>} : memref<1x2xf32, #tpu.memory_space<vmem>>, vector<1x2xf32>,
    return
  }
  func.func @transform_0(%arg0: i32) -> (i32, i32) {
    %c0_i32 = arith.constant 0 : i32
    %c0_i32_0 = arith.constant 0 : i32
    return %c0_i32, %arg0 : i32, i32
  }
  func.func @transform_1(%arg0: i32) -> (i32, i32) {
    %c0_i32 = arith.constant 0 : i32
    %c0_i32_0 = arith.constant 0 : i32
    return %c0_i32, %arg0 : i32, i32
  }
  func.func @transform_2(%arg0: i32) -> (i32, i32) {
    %c0_i32 = arith.constant 0 : i32
    %c0_i32_0 = arith.constant 0 : i32
    %c0_i32_1 = arith.constant 0 : i32
    return %c0_i32, %c0_i32_0 : i32, i32
  }
  func.func @transform_3(%arg0: i32) -> (i32, i32) {
    %c0_i32 = arith.constant 0 : i32
    %c0_i32_0 = arith.constant 0 : i32
    %c0_i32_1 = arith.constant 0 : i32
    return %c0_i32, %c0_i32_0 : i32, i32
  }
  func.func @transform_4(%arg0: i32) -> (i32, i32) {
    %c0_i32 = arith.constant 0 : i32
    %c0_i32_0 = arith.constant 0 : i32
    return %c0_i32, %arg0 : i32, i32
  }
}

</mosaic_0001>

<llo_original>
// kernel: tpu_custom_call.1
$region0: #{tpu_custom_call.1}
  #allocation0 [shape = 'u32[]', space=smem, size = 0x4, offset = 0x4, fixed_abs, tag = 'smem constant byte address 0x4 - core index']
  #allocation1 [shape = 'u32[144,128]{1,0:T(1,128)}', space=vmem, size = 0x12000, scoped, tag = 'internal scratch']
  %s0 = inlined_call_operand.vmem [shape: s32[1,2], index: 0, kind: input, shape index: {}]
  %s1 = inlined_call_operand.vmem [shape: s32[12,2], index: 1, kind: input, shape index: {}]
  %s2 = inlined_call_operand.vmem [shape: f32[32,64], index: 2, kind: input, shape index: {}]
  %s3 = inlined_call_operand.vmem [shape: f32[64,32], index: 3, kind: input, shape index: {}]
  %s4 = inlined_call_operand.hbm [shape: f32[1,2], index: 4, kind: output, shape index: {}]
  %s5 = sld [smem:[#allocation0]]
  $region26: #{tpu_custom_call.1} parent=0
    _
  %s7 = ssub.s32 1, %s5
  %s8 = scalar_select 0, %s7, %s5
  $region1: #{tpu_custom_call.1} parent=0
    #allocation2 [shape = 'u8[512]{0}', space=vmem, size = 0x400, scoped, tag = 'output window, operand 0, single buffered']
    #allocation3 [shape = 's32[1]{0}', space=sflag, size = 0x4, scoped, tag = 'scoped memory for tpu_custom_call.1']
    %9 = vsyncpa [#allocation3], 0
    // Predicated region
    $region2: #{tpu_custom_call.1} parent=1 // pred_check
      _
    $region3: #{tpu_custom_call.1} parent=1 // pred_check_branch
      %11 = sbr.rel (0) target = $region5
    $region4: #{tpu_custom_call.1} parent=1 // pred_region
      _
    $region5: #{tpu_custom_call.1} parent=1 // pred_fallthru
      _
    // Predicated region
    $region6: #{tpu_custom_call.1} parent=1 // pred_check
      _
    $region7: #{tpu_custom_call.1} parent=1 // pred_check_branch
      %13 = sbr.rel (0) target = $region9
    $region8: #{tpu_custom_call.1} parent=1 // pred_region
      _
    $region9: #{tpu_custom_call.1} parent=1 // pred_fallthru
      _
    // Predicated region
    $region10: #{tpu_custom_call.1} parent=1 // pred_check
      _
    $region11: #{tpu_custom_call.1} parent=1 // pred_check_branch
      %15 = sbr.rel (0) target = $region13
    $region12: #{tpu_custom_call.1} parent=1 // pred_region
      _
    $region13: #{tpu_custom_call.1} parent=1 // pred_fallthru
      _
    // Predicated region
    $region14: #{tpu_custom_call.1} parent=1 // pred_check
      _
    $region15: #{tpu_custom_call.1} parent=1 // pred_check_branch
      %17 = sbr.rel (0) target = $region17
    $region16: #{tpu_custom_call.1} parent=1 // pred_region
      _
    $region17: #{tpu_custom_call.1} parent=1 // pred_fallthru
      _
    %v18 = vlaneseq
    %v19 = vshrl.u32 %v18, 7
    %v20 = vadd.s32 %v19, 8
    %v21 = vadd.s32 %v19, 16
    %v22 = vadd.s32 %v19, 24
    %v23 = vadd.s32 %v19, 32
    %v24 = vadd.s32 %v19, 40
    %v25 = vadd.s32 %v19, 48
    %v26 = vadd.s32 %v19, 56
    %v27 = vld [vmem:[%s0] sm:$0x1]
    %v28 = vlaneseq
    %v29 = vshrl.u32 %v28, 7
    %v30 = vsub.s32 0, %v29
    %v31 = vrot.slane %v27, %v30
    %vm32 = vcmp.eq.s32.totalorder %v31, %v19
    %vm33 = vcmp.eq.s32.totalorder %v31, %v20
    %vm34 = vcmp.eq.s32.totalorder %v31, %v21
    %vm35 = vcmp.eq.s32.totalorder %v31, %v22
    %vm36 = vcmp.eq.s32.totalorder %v31, %v23
    %vm37 = vcmp.eq.s32.totalorder %v31, %v24
    %vm38 = vcmp.eq.s32.totalorder %v31, %v25
    %vm39 = vcmp.eq.s32.totalorder %v31, %v26
    %v40 = vsel %vm32, 1, 0
    %v41 = vsel %vm33, 1, 0
    %v42 = vsel %vm34, 1, 0
    %v43 = vsel %vm35, 1, 0
    %v44 = vsel %vm36, 1, 0
    %v45 = vsel %vm37, 1, 0
    %v46 = vsel %vm38, 1, 0
    %v47 = vsel %vm39, 1, 0
    %v48 = vcvt.s32.f32 %v40
    %v49 = vcvt.s32.f32 %v41
    %v50 = vcvt.s32.f32 %v42
    %v51 = vcvt.s32.f32 %v43
    %v52 = vcvt.s32.f32 %v44
    %v53 = vcvt.s32.f32 %v45
    %v54 = vcvt.s32.f32 %v46
    %v55 = vcvt.s32.f32 %v47
    %v56 = vld [vmem:[%s2] sm:$0xff]
    %v57 = vld [vmem:[%s2 + $0x8] sm:$0xff]
    %v58 = vld [vmem:[%s2 + $0x10] sm:$0xff]
    %v59 = vld [vmem:[%s2 + $0x18] sm:$0xff]
    %vm60 = vcmask 523264
    %v62 = vsel %vm60, %v56, 0
    %v65 = vsel %vm60, %v57, 0
    %v68 = vsel %vm60, %v58, 0
    %v71 = vsel %vm60, %v59, 0
    %73 = vmatprep.subr.mxu0 0.0
    %v74 = vand.u32 %v48, 4294901760
    %75 = vmatpush1.msra.mxu0 %v74
    %76 = vmatprep.subr.mxu0 0.0
    %v77 = vand.u32 %v49, 4294901760
    %78 = vmatpush1.msra.mxu0 %v77
    %79 = vmatprep.subr.mxu0 0.0
    %v80 = vand.u32 %v50, 4294901760
    %81 = vmatpush1.msra.mxu0 %v80
    %82 = vmatprep.subr.mxu0 0.0
    %v83 = vand.u32 %v51, 4294901760
    %84 = vmatpush1.msra.mxu0 %v83
    %85 = vmatprep.subr.mxu0 0.0
    %v86 = vand.u32 %v52, 4294901760
    %87 = vmatpush1.msra.mxu0 %v86
    %88 = vmatprep.subr.mxu0 0.0
    %v89 = vand.u32 %v53, 4294901760
    %90 = vmatpush1.msra.mxu0 %v89
    %91 = vmatprep.subr.mxu0 0.0
    %v92 = vand.u32 %v54, 4294901760
    %93 = vmatpush1.msra.mxu0 %v92
    %94 = vmatprep.subr.mxu0 0.0
    %v95 = vand.u32 %v55, 4294901760
    %96 = vmatpush1.msra.mxu0 %v95
    %97 = vmatprep.subr.mxu0 0.0
    %98 = vmatpush1.msra.mxu0 0.0
    %99 = vmatprep.subr.mxu0 0.0
    %100 = vmatpush1.msra.mxu0 0.0
    %101 = vmatprep.subr.mxu0 0.0
    %102 = vmatpush1.msra.mxu0 0.0
    %103 = vmatprep.subr.mxu0 0.0
    %104 = vmatpush1.msra.mxu0 0.0
    %105 = vmatprep.subr.mxu0 0.0
    %106 = vmatpush1.msra.mxu0 0.0
    %107 = vmatprep.subr.mxu0 0.0
    %108 = vmatpush1.msra.mxu0 0.0
    %109 = vmatprep.subr.mxu0 0.0
    %110 = vmatpush1.msra.mxu0 0.0
    %111 = vmatprep.subr.mxu0 0.0
    %112 = vmatpush1.msra.mxu0 0.0
    %113 = vmatprep.subr.mxu0 0.0
    %114 = vmatpush1.msra.mxu0 0.0
    %115 = vmatprep.subr.mxu0 0.0
    %116 = vmatpush1.msra.mxu0 0.0
    %117 = vmatprep.subr.mxu0 0.0
    %118 = vmatpush1.msra.mxu0 0.0
    %119 = vmatprep.subr.mxu0 0.0
    %120 = vmatpush1.msra.mxu0 0.0
    %121 = vmatprep.subr.mxu0 0.0
    %122 = vmatpush1.msra.mxu0 0.0
    %123 = vmatprep.subr.mxu0 0.0
    %124 = vmatpush1.msra.mxu0 0.0
    %125 = vmatprep.subr.mxu0 0.0
    %126 = vmatpush1.msra.mxu0 0.0
    %127 = vmatprep.subr.mxu0 0.0
    %128 = vmatpush1.msra.mxu0 0.0
    %129 = vmatprep.subr.mxu0 0.0
    %130 = vmatpush1.msra.mxu0 0.0
    %131 = vmatprep.subr.mxu0 0.0
    %132 = vmatpush1.msra.mxu0 0.0
    %133 = vmatprep.subr.mxu0 0.0
    %134 = vmatpush1.msra.mxu0 0.0
    %135 = vmatprep.subr.mxu0 0.0
    %136 = vmatpush1.msra.mxu0 0.0
    %137 = vmatprep.subr.mxu0 0.0
    %138 = vmatpush1.msra.mxu0 0.0
    %139 = vmatprep.subr.mxu0 0.0
    %140 = vmatpush1.msra.mxu0 0.0
    %141 = vmatprep.subr.mxu0 0.0
    %142 = vmatpush1.msra.mxu0 0.0
    %143 = vmatprep.subr.mxu0 0.0
    %144 = vmatpush1.msra.mxu0 0.0
    %145 = vmatprep.mubr.f32.mxu0 0.0
    %v146 = vand.u32 %v62, 4294901760
    %v147 = vsub.f32 %v62, %v146
    %v148 = vand.u32 %v147, 4294901760
    %v149 = vsub.f32 %v147, %v148
    %v150 = vand.u32 %v149, 4294901760
    %151 = vmatmul.mubr.f32.gmra.mrb[0].mxu0 %v150
    %v152 = vpop.f32.mrb[0].mxu0
    %v153 = vadd.f32 0.0, %v152
    %v154 = vpop.f32.mrb[0].mxu0
    %155 = vmatprep.mubr.f32.mxu0 0.0
    %v156 = vand.u32 %v65, 4294901760
    %v157 = vsub.f32 %v65, %v156
    %v158 = vand.u32 %v157, 4294901760
    %v159 = vsub.f32 %v157, %v158
    %v160 = vand.u32 %v159, 4294901760
    %161 = vmatmul.mubr.f32.gmra.mrb[0].mxu0 %v160
    %v162 = vpop.f32.mrb[0].mxu0
    %v163 = vadd.f32 0.0, %v162
    %v164 = vpop.f32.mrb[0].mxu0
    %165 = vmatprep.mubr.f32.mxu0 0.0
    %v166 = vand.u32 %v68, 4294901760
    %v167 = vsub.f32 %v68, %v166
    %v168 = vand.u32 %v167, 4294901760
    %v169 = vsub.f32 %v167, %v168
    %v170 = vand.u32 %v169, 4294901760
    %171 = vmatmul.mubr.f32.gmra.mrb[0].mxu0 %v170
    %v172 = vpop.f32.mrb[0].mxu0
    %v173 = vadd.f32 0.0, %v172
    %v174 = vpop.f32.mrb[0].mxu0
    %175 = vmatprep.mubr.f32.mxu0 0.0
    %v176 = vand.u32 %v71, 4294901760
    %v177 = vsub.f32 %v71, %v176
    %v178 = vand.u32 %v177, 4294901760
    %v179 = vsub.f32 %v177, %v178
    %v180 = vand.u32 %v179, 4294901760
    %181 = vmatmul.mubr.f32.gmra.mrb[0].mxu0 %v180
    %v182 = vpop.f32.mrb[0].mxu0
    %v183 = vadd.f32 0.0, %v182
    %v184 = vpop.f32.mrb[0].mxu0
    %185 = vdwg.mxu0
    %186 = vmatprep.subr.mxu0 0.0
    %v187 = vand.u32 %v48, 4294901760
    %v188 = vsub.f32 %v48, %v187
    %v189 = vand.u32 %v188, 4294901760
    %v190 = vsub.f32 %v188, %v189
    %v191 = vand.u32 %v190, 4294901760
    %192 = vmatpush1.msra.mxu0 %v191
    %193 = vmatprep.subr.mxu0 0.0
    %v194 = vand.u32 %v49, 4294901760
    %v195 = vsub.f32 %v49, %v194
    %v196 = vand.u32 %v195, 4294901760
    %v197 = vsub.f32 %v195, %v196
    %v198 = vand.u32 %v197, 4294901760
    %199 = vmatpush1.msra.mxu0 %v198
    %200 = vmatprep.subr.mxu0 0.0
    %v201 = vand.u32 %v50, 4294901760
    %v202 = vsub.f32 %v50, %v201
    %v203 = vand.u32 %v202, 4294901760
    %v204 = vsub.f32 %v202, %v203
    %v205 = vand.u32 %v204, 4294901760
    %206 = vmatpush1.msra.mxu0 %v205
    %207 = vmatprep.subr.mxu0 0.0
    %v208 = vand.u32 %v51, 4294901760
    %v209 = vsub.f32 %v51, %v208
    %v210 = vand.u32 %v209, 4294901760
    %v211 = vsub.f32 %v209, %v210
    %v212 = vand.u32 %v211, 4294901760
    %213 = vmatpush1.msra.mxu0 %v212
    %214 = vmatprep.subr.mxu0 0.0
    %v215 = vand.u32 %v52, 4294901760
    %v216 = vsub.f32 %v52, %v215
    %v217 = vand.u32 %v216, 4294901760
    %v218 = vsub.f32 %v216, %v217
    %v219 = vand.u32 %v218, 4294901760
    %220 = vmatpush1.msra.mxu0 %v219
    %221 = vmatprep.subr.mxu0 0.0
    %v222 = vand.u32 %v53, 4294901760
    %v223 = vsub.f32 %v53, %v222
    %v224 = vand.u32 %v223, 4294901760
    %v225 = vsub.f32 %v223, %v224
    %v226 = vand.u32 %v225, 4294901760
    %227 = vmatpush1.msra.mxu0 %v226
    %228 = vmatprep.subr.mxu0 0.0
    %v229 = vand.u32 %v54, 4294901760
    %v230 = vsub.f32 %v54, %v229
    %v231 = vand.u32 %v230, 4294901760
    %v232 = vsub.f32 %v230, %v231
    %v233 = vand.u32 %v232, 4294901760
    %234 = vmatpush1.msra.mxu0 %v233
    %235 = vmatprep.subr.mxu0 0.0
    %v236 = vand.u32 %v55, 4294901760
    %v237 = vsub.f32 %v55, %v236
    %v238 = vand.u32 %v237, 4294901760
    %v239 = vsub.f32 %v237, %v238
    %v240 = vand.u32 %v239, 4294901760
    %241 = vmatpush1.msra.mxu0 %v240
    %242 = vmatprep.subr.mxu0 0.0
    %243 = vmatpush1.msra.mxu0 0.0
    %244 = vmatprep.subr.mxu0 0.0
    %245 = vmatpush1.msra.mxu0 0.0
    %246 = vmatprep.subr.mxu0 0.0
    %247 = vmatpush1.msra.mxu0 0.0
    %248 = vmatprep.subr.mxu0 0.0
    %249 = vmatpush1.msra.mxu0 0.0
    %250 = vmatprep.subr.mxu0 0.0
    %251 = vmatpush1.msra.mxu0 0.0
    %252 = vmatprep.subr.mxu0 0.0
    %253 = vmatpush1.msra.mxu0 0.0
    %254 = vmatprep.subr.mxu0 0.0
    %255 = vmatpush1.msra.mxu0 0.0
    %256 = vmatprep.subr.mxu0 0.0
    %257 = vmatpush1.msra.mxu0 0.0
    %258 = vmatprep.subr.mxu0 0.0
    %259 = vmatpush1.msra.mxu0 0.0
    %260 = vmatprep.subr.mxu0 0.0
    %261 = vmatpush1.msra.mxu0 0.0
    %262 = vmatprep.subr.mxu0 0.0
    %263 = vmatpush1.msra.mxu0 0.0
    %264 = vmatprep.subr.mxu0 0.0
    %265 = vmatpush1.msra.mxu0 0.0
    %266 = vmatprep.subr.mxu0 0.0
    %267 = vmatpush1.msra.mxu0 0.0
    %268 = vmatprep.subr.mxu0 0.0
    %269 = vmatpush1.msra.mxu0 0.0
    %270 = vmatprep.subr.mxu0 0.0
    %271 = vmatpush1.msra.mxu0 0.0
    %272 = vmatprep.subr.mxu0 0.0
    %273 = vmatpush1.msra.mxu0 0.0
    %274 = vmatprep.subr.mxu0 0.0
    %275 = vmatpush1.msra.mxu0 0.0
    %276 = vmatprep.subr.mxu0 0.0
    %277 = vmatpush1.msra.mxu0 0.0
    %278 = vmatprep.subr.mxu0 0.0
    %279 = vmatpush1.msra.mxu0 0.0
    %280 = vmatprep.subr.mxu0 0.0
    %281 = vmatpush1.msra.mxu0 0.0
    %282 = vmatprep.subr.mxu0 0.0
    %283 = vmatpush1.msra.mxu0 0.0
    %284 = vmatprep.subr.mxu0 0.0
    %285 = vmatpush1.msra.mxu0 0.0
    %286 = vmatprep.subr.mxu0 0.0
    %287 = vmatpush1.msra.mxu0 0.0
    %288 = vmatprep.subr.mxu0 0.0
    %289 = vmatpush1.msra.mxu0 0.0
    %290 = vmatprep.mubr.f32.mxu0 0.0
    %v291 = vand.u32 %v62, 4294901760
    %292 = vmatmul.mubr.f32.gmra.mrb[0].mxu0 %v291
    %v293 = vpop.f32.mrb[0].mxu0
    %v294 = vadd.f32 %v153, %v293
    %v295 = vpop.f32.mrb[0].mxu0
    %296 = vmatprep.mubr.f32.mxu0 0.0
    %v297 = vand.u32 %v65, 4294901760
    %298 = vmatmul.mubr.f32.gmra.mrb[0].mxu0 %v297
    %v299 = vpop.f32.mrb[0].mxu0
    %v300 = vadd.f32 %v163, %v299
    %v301 = vpop.f32.mrb[0].mxu0
    %302 = vmatprep.mubr.f32.mxu0 0.0
    %v303 = vand.u32 %v68, 4294901760
    %304 = vmatmul.mubr.f32.gmra.mrb[0].mxu0 %v303
    %v305 = vpop.f32.mrb[0].mxu0
    %v306 = vadd.f32 %v173, %v305
    %v307 = vpop.f32.mrb[0].mxu0
    %308 = vmatprep.mubr.f32.mxu0 0.0
    %v309 = vand.u32 %v71, 4294901760
    %310 = vmatmul.mubr.f32.gmra.mrb[0].mxu0 %v309
    %v311 = vpop.f32.mrb[0].mxu0
    %v312 = vadd.f32 %v183, %v311
    %v313 = vpop.f32.mrb[0].mxu0
    %314 = vdwg.mxu0
    %315 = vmatprep.subr.mxu0 0.0
    %v316 = vand.u32 %v48, 4294901760
    %v317 = vsub.f32 %v48, %v316
    %318 = vmatpush1.msra.mxu0 %v317
    %319 = vmatprep.subr.mxu0 0.0
    %v320 = vand.u32 %v49, 4294901760
    %v321 = vsub.f32 %v49, %v320
    %322 = vmatpush1.msra.mxu0 %v321
    %323 = vmatprep.subr.mxu0 0.0
    %v324 = vand.u32 %v50, 4294901760
    %v325 = vsub.f32 %v50, %v324
    %326 = vmatpush1.msra.mxu0 %v325
    %327 = vmatprep.subr.mxu0 0.0
    %v328 = vand.u32 %v51, 4294901760
    %v329 = vsub.f32 %v51, %v328
    %330 = vmatpush1.msra.mxu0 %v329
    %331 = vmatprep.subr.mxu0 0.0
    %v332 = vand.u32 %v52, 4294901760
    %v333 = vsub.f32 %v52, %v332
    %334 = vmatpush1.msra.mxu0 %v333
    %335 = vmatprep.subr.mxu0 0.0
    %v336 = vand.u32 %v53, 4294901760
    %v337 = vsub.f32 %v53, %v336
    %338 = vmatpush1.msra.mxu0 %v337
    %339 = vmatprep.subr.mxu0 0.0
    %v340 = vand.u32 %v54, 4294901760
    %v341 = vsub.f32 %v54, %v340
    %342 = vmatpush1.msra.mxu0 %v341
    %343 = vmatprep.subr.mxu0 0.0
    %v344 = vand.u32 %v55, 4294901760
    %v345 = vsub.f32 %v55, %v344
    %346 = vmatpush1.msra.mxu0 %v345
    %347 = vmatprep.subr.mxu0 0.0
    %348 = vmatpush1.msra.mxu0 0.0
    %349 = vmatprep.subr.mxu0 0.0
    %350 = vmatpush1.msra.mxu0 0.0
    %351 = vmatprep.subr.mxu0 0.0
    %352 = vmatpush1.msra.mxu0 0.0
    %353 = vmatprep.subr.mxu0 0.0
    %354 = vmatpush1.msra.mxu0 0.0
    %355 = vmatprep.subr.mxu0 0.0
    %356 = vmatpush1.msra.mxu0 0.0
    %357 = vmatprep.subr.mxu0 0.0
    %358 = vmatpush1.msra.mxu0 0.0
    %359 = vmatprep.subr.mxu0 0.0
    %360 = vmatpush1.msra.mxu0 0.0
    %361 = vmatprep.subr.mxu0 0.0
    %362 = vmatpush1.msra.mxu0 0.0
    %363 = vmatprep.subr.mxu0 0.0
    %364 = vmatpush1.msra.mxu0 0.0
    %365 = vmatprep.subr.mxu0 0.0
    %366 = vmatpush1.msra.mxu0 0.0
    %367 = vmatprep.subr.mxu0 0.0
    %368 = vmatpush1.msra.mxu0 0.0
    %369 = vmatprep.subr.mxu0 0.0
    %370 = vmatpush1.msra.mxu0 0.0
    %371 = vmatprep.subr.mxu0 0.0
    %372 = vmatpush1.msra.mxu0 0.0
    %373 = vmatprep.subr.mxu0 0.0
    %374 = vmatpush1.msra.mxu0 0.0
    %375 = vmatprep.subr.mxu0 0.0
    %376 = vmatpush1.msra.mxu0 0.0
    %377 = vmatprep.subr.mxu0 0.0
    %378 = vmatpush1.msra.mxu0 0.0
    %379 = vmatprep.subr.mxu0 0.0
    %380 = vmatpush1.msra.mxu0 0.0
    %381 = vmatprep.subr.mxu0 0.0
    %382 = vmatpush1.msra.mxu0 0.0
    %383 = vmatprep.subr.mxu0 0.0
    %384 = vmatpush1.msra.mxu0 0.0
    %385 = vmatprep.subr.mxu0 0.0
    %386 = vmatpush1.msra.mxu0 0.0
    %387 = vmatprep.subr.mxu0 0.0
    %388 = vmatpush1.msra.mxu0 0.0
    %389 = vmatprep.subr.mxu0 0.0
    %390 = vmatpush1.msra.mxu0 0.0
    %391 = vmatprep.subr.mxu0 0.0
    %392 = vmatpush1.msra.mxu0 0.0
    %393 = vmatprep.subr.mxu0 0.0
    %394 = vmatpush1.msra.mxu0 0.0
    %395 = vmatprep.mubr.f32.mxu0 0.0
    %v396 = vand.u32 %v62, 4294901760
    %v397 = vsub.f32 %v62, %v396
    %398 = vmatmul.mubr.f32.gmra.mrb[0].mxu0 %v397
    %v399 = vpop.f32.mrb[0].mxu0
    %v400 = vadd.f32 %v294, %v399
    %v401 = vpop.f32.mrb[0].mxu0
    %402 = vmatprep.mubr.f32.mxu0 0.0
    %v403 = vand.u32 %v65, 4294901760
    %v404 = vsub.f32 %v65, %v403
    %405 = vmatmul.mubr.f32.gmra.mrb[0].mxu0 %v404
    %v406 = vpop.f32.mrb[0].mxu0
    %v407 = vadd.f32 %v300, %v406
    %v408 = vpop.f32.mrb[0].mxu0
    %409 = vmatprep.mubr.f32.mxu0 0.0
    %v410 = vand.u32 %v68, 4294901760
    %v411 = vsub.f32 %v68, %v410
    %412 = vmatmul.mubr.f32.gmra.mrb[0].mxu0 %v411
    %v413 = vpop.f32.mrb[0].mxu0
    %v414 = vadd.f32 %v306, %v413
    %v415 = vpop.f32.mrb[0].mxu0
    %416 = vmatprep.mubr.f32.mxu0 0.0
    %v417 = vand.u32 %v71, 4294901760
    %v418 = vsub.f32 %v71, %v417
    %419 = vmatmul.mubr.f32.gmra.mrb[0].mxu0 %v418
    %v420 = vpop.f32.mrb[0].mxu0
    %v421 = vadd.f32 %v312, %v420
    %v422 = vpop.f32.mrb[0].mxu0
    %423 = vdwg.mxu0
    %424 = vmatprep.subr.mxu0 0.0
    %v425 = vand.u32 %v48, 4294901760
    %426 = vmatpush1.msra.mxu0 %v425
    %427 = vmatprep.subr.mxu0 0.0
    %v428 = vand.u32 %v49, 4294901760
    %429 = vmatpush1.msra.mxu0 %v428
    %430 = vmatprep.subr.mxu0 0.0
    %v431 = vand.u32 %v50, 4294901760
    %432 = vmatpush1.msra.mxu0 %v431
    %433 = vmatprep.subr.mxu0 0.0
    %v434 = vand.u32 %v51, 4294901760
    %435 = vmatpush1.msra.mxu0 %v434
    %436 = vmatprep.subr.mxu0 0.0
    %v437 = vand.u32 %v52, 4294901760
    %438 = vmatpush1.msra.mxu0 %v437
    %439 = vmatprep.subr.mxu0 0.0
    %v440 = vand.u32 %v53, 4294901760
    %441 = vmatpush1.msra.mxu0 %v440
    %442 = vmatprep.subr.mxu0 0.0
    %v443 = vand.u32 %v54, 4294901760
    %444 = vmatpush1.msra.mxu0 %v443
    %445 = vmatprep.subr.mxu0 0.0
    %v446 = vand.u32 %v55, 4294901760
    %447 = vmatpush1.msra.mxu0 %v446
    %448 = vmatprep.subr.mxu0 0.0
    %449 = vmatpush1.msra.mxu0 0.0
    %450 = vmatprep.subr.mxu0 0.0
    %451 = vmatpush1.msra.mxu0 0.0
    %452 = vmatprep.subr.mxu0 0.0
    %453 = vmatpush1.msra.mxu0 0.0
    %454 = vmatprep.subr.mxu0 0.0
    %455 = vmatpush1.msra.mxu0 0.0
    %456 = vmatprep.subr.mxu0 0.0
    %457 = vmatpush1.msra.mxu0 0.0
    %458 = vmatprep.subr.mxu0 0.0
    %459 = vmatpush1.msra.mxu0 0.0
    %460 = vmatprep.subr.mxu0 0.0
    %461 = vmatpush1.msra.mxu0 0.0
    %462 = vmatprep.subr.mxu0 0.0
    %463 = vmatpush1.msra.mxu0 0.0
    %464 = vmatprep.subr.mxu0 0.0
    %465 = vmatpush1.msra.mxu0 0.0
    %466 = vmatprep.subr.mxu0 0.0
    %467 = vmatpush1.msra.mxu0 0.0
    %468 = vmatprep.subr.mxu0 0.0
    %469 = vmatpush1.msra.mxu0 0.0
    %470 = vmatprep.subr.mxu0 0.0
    %471 = vmatpush1.msra.mxu0 0.0
    %472 = vmatprep.subr.mxu0 0.0
    %473 = vmatpush1.msra.mxu0 0.0
    %474 = vmatprep.subr.mxu0 0.0
    %475 = vmatpush1.msra.mxu0 0.0
    %476 = vmatprep.subr.mxu0 0.0
    %477 = vmatpush1.msra.mxu0 0.0
    %478 = vmatprep.subr.mxu0 0.0
    %479 = vmatpush1.msra.mxu0 0.0
    %480 = vmatprep.subr.mxu0 0.0
    %481 = vmatpush1.msra.mxu0 0.0
    %482 = vmatprep.subr.mxu0 0.0
    %483 = vmatpush1.msra.mxu0 0.0
    %484 = vmatprep.subr.mxu0 0.0
    %485 = vmatpush1.msra.mxu0 0.0
    %486 = vmatprep.subr.mxu0 0.0
    %487 = vmatpush1.msra.mxu0 0.0
    %488 = vmatprep.subr.mxu0 0.0
    %489 = vmatpush1.msra.mxu0 0.0
    %490 = vmatprep.subr.mxu0 0.0
    %491 = vmatpush1.msra.mxu0 0.0
    %492 = vmatprep.subr.mxu0 0.0
    %493 = vmatpush1.msra.mxu0 0.0
    %494 = vmatprep.subr.mxu0 0.0
    %495 = vmatpush1.msra.mxu0 0.0
    %496 = vmatprep.mubr.f32.mxu0 0.0
    %v497 = vand.u32 %v62, 4294901760
    %v498 = vsub.f32 %v62, %v497
    %v499 = vand.u32 %v498, 4294901760
    %500 = vmatmul.mubr.f32.gmra.mrb[0].mxu0 %v499
    %v501 = vpop.f32.mrb[0].mxu0
    %v502 = vadd.f32 %v400, %v501
    %v503 = vpop.f32.mrb[0].mxu0
    %504 = vmatprep.mubr.f32.mxu0 0.0
    %v505 = vand.u32 %v65, 4294901760
    %v506 = vsub.f32 %v65, %v505
    %v507 = vand.u32 %v506, 4294901760
    %508 = vmatmul.mubr.f32.gmra.mrb[0].mxu0 %v507
    %v509 = vpop.f32.mrb[0].mxu0
    %v510 = vadd.f32 %v407, %v509
    %v511 = vpop.f32.mrb[0].mxu0
    %512 = vmatprep.mubr.f32.mxu0 0.0
    %v513 = vand.u32 %v68, 4294901760
    %v514 = vsub.f32 %v68, %v513
    %v515 = vand.u32 %v514, 4294901760
    %516 = vmatmul.mubr.f32.gmra.mrb[0].mxu0 %v515
    %v517 = vpop.f32.mrb[0].mxu0
    %v518 = vadd.f32 %v414, %v517
    %v519 = vpop.f32.mrb[0].mxu0
    %520 = vmatprep.mubr.f32.mxu0 0.0
    %v521 = vand.u32 %v71, 4294901760
    %v522 = vsub.f32 %v71, %v521
    %v523 = vand.u32 %v522, 4294901760
    %524 = vmatmul.mubr.f32.gmra.mrb[0].mxu0 %v523
    %v525 = vpop.f32.mrb[0].mxu0
    %v526 = vadd.f32 %v421, %v525
    %v527 = vpop.f32.mrb[0].mxu0
    %528 = vdwg.mxu0
    %529 = vmatprep.subr.mxu0 0.0
    %v530 = vand.u32 %v48, 4294901760
    %v531 = vsub.f32 %v48, %v530
    %v532 = vand.u32 %v531, 4294901760
    %533 = vmatpush1.msra.mxu0 %v532
    %534 = vmatprep.subr.mxu0 0.0
    %v535 = vand.u32 %v49, 4294901760
    %v536 = vsub.f32 %v49, %v535
    %v537 = vand.u32 %v536, 4294901760
    %538 = vmatpush1.msra.mxu0 %v537
    %539 = vmatprep.subr.mxu0 0.0
    %v540 = vand.u32 %v50, 4294901760
    %v541 = vsub.f32 %v50, %v540
    %v542 = vand.u32 %v541, 4294901760
    %543 = vmatpush1.msra.mxu0 %v542
    %544 = vmatprep.subr.mxu0 0.0
    %v545 = vand.u32 %v51, 4294901760
    %v546 = vsub.f32 %v51, %v545
    %v547 = vand.u32 %v546, 4294901760
    %548 = vmatpush1.msra.mxu0 %v547
    %549 = vmatprep.subr.mxu0 0.0
    %v550 = vand.u32 %v52, 4294901760
    %v551 = vsub.f32 %v52, %v550
    %v552 = vand.u32 %v551, 4294901760
    %553 = vmatpush1.msra.mxu0 %v552
    %554 = vmatprep.subr.mxu0 0.0
    %v555 = vand.u32 %v53, 4294901760
    %v556 = vsub.f32 %v53, %v555
    %v557 = vand.u32 %v556, 4294901760
    %558 = vmatpush1.msra.mxu0 %v557
    %559 = vmatprep.subr.mxu0 0.0
    %v560 = vand.u32 %v54, 4294901760
    %v561 = vsub.f32 %v54, %v560
    %v562 = vand.u32 %v561, 4294901760
    %563 = vmatpush1.msra.mxu0 %v562
    %564 = vmatprep.subr.mxu0 0.0
    %v565 = vand.u32 %v55, 4294901760
    %v566 = vsub.f32 %v55, %v565
    %v567 = vand.u32 %v566, 4294901760
    %568 = vmatpush1.msra.mxu0 %v567
    %569 = vmatprep.subr.mxu0 0.0
    %570 = vmatpush1.msra.mxu0 0.0
    %571 = vmatprep.subr.mxu0 0.0
    %572 = vmatpush1.msra.mxu0 0.0
    %573 = vmatprep.subr.mxu0 0.0
    %574 = vmatpush1.msra.mxu0 0.0
    %575 = vmatprep.subr.mxu0 0.0
    %576 = vmatpush1.msra.mxu0 0.0
    %577 = vmatprep.subr.mxu0 0.0
    %578 = vmatpush1.msra.mxu0 0.0
    %579 = vmatprep.subr.mxu0 0.0
    %580 = vmatpush1.msra.mxu0 0.0
    %581 = vmatprep.subr.mxu0 0.0
    %582 = vmatpush1.msra.mxu0 0.0
    %583 = vmatprep.subr.mxu0 0.0
    %584 = vmatpush1.msra.mxu0 0.0
    %585 = vmatprep.subr.mxu0 0.0
    %586 = vmatpush1.msra.mxu0 0.0
    %587 = vmatprep.subr.mxu0 0.0
    %588 = vmatpush1.msra.mxu0 0.0
    %589 = vmatprep.subr.mxu0 0.0
    %590 = vmatpush1.msra.mxu0 0.0
    %591 = vmatprep.subr.mxu0 0.0
    %592 = vmatpush1.msra.mxu0 0.0
    %593 = vmatprep.subr.mxu0 0.0
    %594 = vmatpush1.msra.mxu0 0.0
    %595 = vmatprep.subr.mxu0 0.0
    %596 = vmatpush1.msra.mxu0 0.0
    %597 = vmatprep.subr.mxu0 0.0
    %598 = vmatpush1.msra.mxu0 0.0
    %599 = vmatprep.subr.mxu0 0.0
    %600 = vmatpush1.msra.mxu0 0.0
    %601 = vmatprep.subr.mxu0 0.0
    %602 = vmatpush1.msra.mxu0 0.0
    %603 = vmatprep.subr.mxu0 0.0
    %604 = vmatpush1.msra.mxu0 0.0
    %605 = vmatprep.subr.mxu0 0.0
    %606 = vmatpush1.msra.mxu0 0.0
    %607 = vmatprep.subr.mxu0 0.0
    %608 = vmatpush1.msra.mxu0 0.0
    %609 = vmatprep.subr.mxu0 0.0
    %610 = vmatpush1.msra.mxu0 0.0
    %611 = vmatprep.subr.mxu0 0.0
    %612 = vmatpush1.msra.mxu0 0.0
    %613 = vmatprep.subr.mxu0 0.0
    %614 = vmatpush1.msra.mxu0 0.0
    %615 = vmatprep.subr.mxu0 0.0
    %616 = vmatpush1.msra.mxu0 0.0
    %617 = vmatprep.mubr.f32.mxu0 0.0
    %v618 = vand.u32 %v62, 4294901760
    %619 = vmatmul.mubr.f32.gmra.mrb[0].mxu0 %v618
    %v620 = vpop.f32.mrb[0].mxu0
    %v621 = vadd.f32 %v502, %v620
    %v622 = vpop.f32.mrb[0].mxu0
    %623 = vmatprep.mubr.f32.mxu0 0.0
    %v624 = vand.u32 %v65, 4294901760
    %625 = vmatmul.mubr.f32.gmra.mrb[0].mxu0 %v624
    %v626 = vpop.f32.mrb[0].mxu0
    %v627 = vadd.f32 %v510, %v626
    %v628 = vpop.f32.mrb[0].mxu0
    %629 = vmatprep.mubr.f32.mxu0 0.0
    %v630 = vand.u32 %v68, 4294901760
    %631 = vmatmul.mubr.f32.gmra.mrb[0].mxu0 %v630
    %v632 = vpop.f32.mrb[0].mxu0
    %v633 = vadd.f32 %v518, %v632
    %v634 = vpop.f32.mrb[0].mxu0
    %635 = vmatprep.mubr.f32.mxu0 0.0
    %v636 = vand.u32 %v71, 4294901760
    %637 = vmatmul.mubr.f32.gmra.mrb[0].mxu0 %v636
    %v638 = vpop.f32.mrb[0].mxu0
    %v639 = vadd.f32 %v526, %v638
    %v640 = vpop.f32.mrb[0].mxu0
    %641 = vdwg.mxu0
    %642 = vmatprep.subr.mxu0 0.0
    %v643 = vand.u32 %v48, 4294901760
    %644 = vmatpush1.msra.mxu0 %v643
    %645 = vmatprep.subr.mxu0 0.0
    %v646 = vand.u32 %v49, 4294901760
    %647 = vmatpush1.msra.mxu0 %v646
    %648 = vmatprep.subr.mxu0 0.0
    %v649 = vand.u32 %v50, 4294901760
    %650 = vmatpush1.msra.mxu0 %v649
    %651 = vmatprep.subr.mxu0 0.0
    %v652 = vand.u32 %v51, 4294901760
    %653 = vmatpush1.msra.mxu0 %v652
    %654 = vmatprep.subr.mxu0 0.0
    %v655 = vand.u32 %v52, 4294901760
    %656 = vmatpush1.msra.mxu0 %v655
    %657 = vmatprep.subr.mxu0 0.0
    %v658 = vand.u32 %v53, 4294901760
    %659 = vmatpush1.msra.mxu0 %v658
    %660 = vmatprep.subr.mxu0 0.0
    %v661 = vand.u32 %v54, 4294901760
    %662 = vmatpush1.msra.mxu0 %v661
    %663 = vmatprep.subr.mxu0 0.0
    %v664 = vand.u32 %v55, 4294901760
    %665 = vmatpush1.msra.mxu0 %v664
    %666 = vmatprep.subr.mxu0 0.0
    %667 = vmatpush1.msra.mxu0 0.0
    %668 = vmatprep.subr.mxu0 0.0
    %669 = vmatpush1.msra.mxu0 0.0
    %670 = vmatprep.subr.mxu0 0.0
    %671 = vmatpush1.msra.mxu0 0.0
    %672 = vmatprep.subr.mxu0 0.0
    %673 = vmatpush1.msra.mxu0 0.0
    %674 = vmatprep.subr.mxu0 0.0
    %675 = vmatpush1.msra.mxu0 0.0
    %676 = vmatprep.subr.mxu0 0.0
    %677 = vmatpush1.msra.mxu0 0.0
    %678 = vmatprep.subr.mxu0 0.0
    %679 = vmatpush1.msra.mxu0 0.0
    %680 = vmatprep.subr.mxu0 0.0
    %681 = vmatpush1.msra.mxu0 0.0
    %682 = vmatprep.subr.mxu0 0.0
    %683 = vmatpush1.msra.mxu0 0.0
    %684 = vmatprep.subr.mxu0 0.0
    %685 = vmatpush1.msra.mxu0 0.0
    %686 = vmatprep.subr.mxu0 0.0
    %687 = vmatpush1.msra.mxu0 0.0
    %688 = vmatprep.subr.mxu0 0.0
    %689 = vmatpush1.msra.mxu0 0.0
    %690 = vmatprep.subr.mxu0 0.0
    %691 = vmatpush1.msra.mxu0 0.0
    %692 = vmatprep.subr.mxu0 0.0
    %693 = vmatpush1.msra.mxu0 0.0
    %694 = vmatprep.subr.mxu0 0.0
    %695 = vmatpush1.msra.mxu0 0.0
    %696 = vmatprep.subr.mxu0 0.0
    %697 = vmatpush1.msra.mxu0 0.0
    %698 = vmatprep.subr.mxu0 0.0
    %699 = vmatpush1.msra.mxu0 0.0
    %700 = vmatprep.subr.mxu0 0.0
    %701 = vmatpush1.msra.mxu0 0.0
    %702 = vmatprep.subr.mxu0 0.0
    %703 = vmatpush1.msra.mxu0 0.0
    %704 = vmatprep.subr.mxu0 0.0
    %705 = vmatpush1.msra.mxu0 0.0
    %706 = vmatprep.subr.mxu0 0.0
    %707 = vmatpush1.msra.mxu0 0.0
    %708 = vmatprep.subr.mxu0 0.0
    %709 = vmatpush1.msra.mxu0 0.0
    %710 = vmatprep.subr.mxu0 0.0
    %711 = vmatpush1.msra.mxu0 0.0
    %712 = vmatprep.subr.mxu0 0.0
    %713 = vmatpush1.msra.mxu0 0.0
    %714 = vmatprep.mubr.f32.mxu0 0.0
    %v715 = vand.u32 %v62, 4294901760
    %716 = vmatmul.mubr.f32.gmra.mrb[0].mxu0 %v715
    %v717 = vpop.f32.mrb[0].mxu0
    %v718 = vadd.f32 %v621, %v717
    %v719 = vpop.f32.mrb[0].mxu0
    %720 = vmatprep.mubr.f32.mxu0 0.0
    %v721 = vand.u32 %v65, 4294901760
    %722 = vmatmul.mubr.f32.gmra.mrb[0].mxu0 %v721
    %v723 = vpop.f32.mrb[0].mxu0
    %v724 = vadd.f32 %v627, %v723
    %v725 = vpop.f32.mrb[0].mxu0
    %726 = vmatprep.mubr.f32.mxu0 0.0
    %v727 = vand.u32 %v68, 4294901760
    %728 = vmatmul.mubr.f32.gmra.mrb[0].mxu0 %v727
    %v729 = vpop.f32.mrb[0].mxu0
    %v730 = vadd.f32 %v633, %v729
    %v731 = vpop.f32.mrb[0].mxu0
    %732 = vmatprep.mubr.f32.mxu0 0.0
    %v733 = vand.u32 %v71, 4294901760
    %734 = vmatmul.mubr.f32.gmra.mrb[0].mxu0 %v733
    %v735 = vpop.f32.mrb[0].mxu0
    %v736 = vadd.f32 %v639, %v735
    %v737 = vpop.f32.mrb[0].mxu0
    %738 = vdwg.mxu0
    %v739 = vld [vmem:[%s3] sm:$0xff]
    %v740 = vld [vmem:[%s3 + $0x8] sm:$0xff]
    %v741 = vld [vmem:[%s3 + $0x10] sm:$0xff]
    %v742 = vld [vmem:[%s3 + $0x18] sm:$0xff]
    %v743 = vld [vmem:[%s3 + $0x20] sm:$0xff]
    %v744 = vld [vmem:[%s3 + $0x28] sm:$0xff]
    %v745 = vld [vmem:[%s3 + $0x30] sm:$0xff]
    %v746 = vld [vmem:[%s3 + $0x38] sm:$0xff]
    %vm747 = vcmask 261120
    %v749 = vsel %vm747, %v739, 0
    %v752 = vsel %vm747, %v740, 0
    %v755 = vsel %vm747, %v741, 0
    %v758 = vsel %vm747, %v742, 0
    %v761 = vsel %vm747, %v743, 0
    %v764 = vsel %vm747, %v744, 0
    %v767 = vsel %vm747, %v745, 0
    %v770 = vsel %vm747, %v746, 0
    %772 = vmatprep.subr.mxu0 0.0
    %v773 = vand.u32 %v718, 4294901760
    %774 = vmatpush1.msra.mxu0 %v773
    %775 = vmatprep.subr.mxu0 0.0
    %v776 = vand.u32 %v724, 4294901760
    %777 = vmatpush1.msra.mxu0 %v776
    %778 = vmatprep.subr.mxu0 0.0
    %v779 = vand.u32 %v730, 4294901760
    %780 = vmatpush1.msra.mxu0 %v779
    %781 = vmatprep.subr.mxu0 0.0
    %v782 = vand.u32 %v736, 4294901760
    %783 = vmatpush1.msra.mxu0 %v782
    %784 = vmatprep.subr.mxu0 0.0
    %785 = vmatpush1.msra.mxu0 0.0
    %786 = vmatprep.subr.mxu0 0.0
    %787 = vmatpush1.msra.mxu0 0.0
    %788 = vmatprep.subr.mxu0 0.0
    %789 = vmatpush1.msra.mxu0 0.0
    %790 = vmatprep.subr.mxu0 0.0
    %791 = vmatpush1.msra.mxu0 0.0
    %792 = vmatprep.subr.mxu0 0.0
    %793 = vmatpush1.msra.mxu0 0.0
    %794 = vmatprep.subr.mxu0 0.0
    %795 = vmatpush1.msra.mxu0 0.0
    %796 = vmatprep.subr.mxu0 0.0
    %797 = vmatpush1.msra.mxu0 0.0
    %798 = vmatprep.subr.mxu0 0.0
    %799 = vmatpush1.msra.mxu0 0.0
    %800 = vmatprep.subr.mxu0 0.0
    %801 = vmatpush1.msra.mxu0 0.0
    %802 = vmatprep.subr.mxu0 0.0
    %803 = vmatpush1.msra.mxu0 0.0
    %804 = vmatprep.subr.mxu0 0.0
    %805 = vmatpush1.msra.mxu0 0.0
    %806 = vmatprep.subr.mxu0 0.0
    %807 = vmatpush1.msra.mxu0 0.0
    %808 = vmatprep.subr.mxu0 0.0
    %809 = vmatpush1.msra.mxu0 0.0
    %810 = vmatprep.subr.mxu0 0.0
    %811 = vmatpush1.msra.mxu0 0.0
    %812 = vmatprep.subr.mxu0 0.0
    %813 = vmatpush1.msra.mxu0 0.0
    %814 = vmatprep.subr.mxu0 0.0
    %815 = vmatpush1.msra.mxu0 0.0
    %816 = vmatprep.subr.mxu0 0.0
    %817 = vmatpush1.msra.mxu0 0.0
    %818 = vmatprep.subr.mxu0 0.0
    %819 = vmatpush1.msra.mxu0 0.0
    %820 = vmatprep.subr.mxu0 0.0
    %821 = vmatpush1.msra.mxu0 0.0
    %822 = vmatprep.subr.mxu0 0.0
    %823 = vmatpush1.msra.mxu0 0.0
    %824 = vmatprep.subr.mxu0 0.0
    %825 = vmatpush1.msra.mxu0 0.0
    %826 = vmatprep.subr.mxu0 0.0
    %827 = vmatpush1.msra.mxu0 0.0
    %828 = vmatprep.subr.mxu0 0.0
    %829 = vmatpush1.msra.mxu0 0.0
    %830 = vmatprep.subr.mxu0 0.0
    %831 = vmatpush1.msra.mxu0 0.0
    %832 = vmatprep.subr.mxu0 0.0
    %833 = vmatpush1.msra.mxu0 0.0
    %834 = vmatprep.subr.mxu0 0.0
    %835 = vmatpush1.msra.mxu0 0.0
    %836 = vmatprep.subr.mxu0 0.0
    %837 = vmatpush1.msra.mxu0 0.0
    %838 = vmatprep.subr.mxu0 0.0
    %839 = vmatpush1.msra.mxu0 0.0
    %840 = vmatprep.mubr.f32.mxu0 0.0
    %v841 = vand.u32 %v749, 4294901760
    %v842 = vsub.f32 %v749, %v841
    %v843 = vand.u32 %v842, 4294901760
    %v844 = vsub.f32 %v842, %v843
    %v845 = vand.u32 %v844, 4294901760
    %846 = vmatmul.mubr.f32.gmra.mrb[0].mxu0 %v845
    %v847 = vpop.f32.mrb[0].mxu0
    %v848 = vadd.f32 0.0, %v847
    %v849 = vpop.f32.mrb[0].mxu0
    %850 = vmatprep.mubr.f32.mxu0 0.0
    %v851 = vand.u32 %v752, 4294901760
    %v852 = vsub.f32 %v752, %v851
    %v853 = vand.u32 %v852, 4294901760
    %v854 = vsub.f32 %v852, %v853
    %v855 = vand.u32 %v854, 4294901760
    %856 = vmatmul.mubr.f32.gmra.mrb[0].mxu0 %v855
    %v857 = vpop.f32.mrb[0].mxu0
    %v858 = vadd.f32 0.0, %v857
    %v859 = vpop.f32.mrb[0].mxu0
    %860 = vmatprep.mubr.f32.mxu0 0.0
    %v861 = vand.u32 %v755, 4294901760
    %v862 = vsub.f32 %v755, %v861
    %v863 = vand.u32 %v862, 4294901760
    %v864 = vsub.f32 %v862, %v863
    %v865 = vand.u32 %v864, 4294901760
    %866 = vmatmul.mubr.f32.gmra.mrb[0].mxu0 %v865
    %v867 = vpop.f32.mrb[0].mxu0
    %v868 = vadd.f32 0.0, %v867
    %v869 = vpop.f32.mrb[0].mxu0
    %870 = vmatprep.mubr.f32.mxu0 0.0
    %v871 = vand.u32 %v758, 4294901760
    %v872 = vsub.f32 %v758, %v871
    %v873 = vand.u32 %v872, 4294901760
    %v874 = vsub.f32 %v872, %v873
    %v875 = vand.u32 %v874, 4294901760
    %876 = vmatmul.mubr.f32.gmra.mrb[0].mxu0 %v875
    %v877 = vpop.f32.mrb[0].mxu0
    %v878 = vadd.f32 0.0, %v877
    %v879 = vpop.f32.mrb[0].mxu0
    %880 = vmatprep.mubr.f32.mxu0 0.0
    %v881 = vand.u32 %v761, 4294901760
    %v882 = vsub.f32 %v761, %v881
    %v883 = vand.u32 %v882, 4294901760
    %v884 = vsub.f32 %v882, %v883
    %v885 = vand.u32 %v884, 4294901760
    %886 = vmatmul.mubr.f32.gmra.mrb[0].mxu0 %v885
    %v887 = vpop.f32.mrb[0].mxu0
    %v888 = vadd.f32 0.0, %v887
    %v889 = vpop.f32.mrb[0].mxu0
    %890 = vmatprep.mubr.f32.mxu0 0.0
    %v891 = vand.u32 %v764, 4294901760
    %v892 = vsub.f32 %v764, %v891
    %v893 = vand.u32 %v892, 4294901760
    %v894 = vsub.f32 %v892, %v893
    %v895 = vand.u32 %v894, 4294901760
    %896 = vmatmul.mubr.f32.gmra.mrb[0].mxu0 %v895
    %v897 = vpop.f32.mrb[0].mxu0
    %v898 = vadd.f32 0.0, %v897
    %v899 = vpop.f32.mrb[0].mxu0
    %900 = vmatprep.mubr.f32.mxu0 0.0
    %v901 = vand.u32 %v767, 4294901760
    %v902 = vsub.f32 %v767, %v901
    %v903 = vand.u32 %v902, 4294901760
    %v904 = vsub.f32 %v902, %v903
    %v905 = vand.u32 %v904, 4294901760
    %906 = vmatmul.mubr.f32.gmra.mrb[0].mxu0 %v905
    %v907 = vpop.f32.mrb[0].mxu0
    %v908 = vadd.f32 0.0, %v907
    %v909 = vpop.f32.mrb[0].mxu0
    %910 = vmatprep.mubr.f32.mxu0 0.0
    %v911 = vand.u32 %v770, 4294901760
    %v912 = vsub.f32 %v770, %v911
    %v913 = vand.u32 %v912, 4294901760
    %v914 = vsub.f32 %v912, %v913
    %v915 = vand.u32 %v914, 4294901760
    %916 = vmatmul.mubr.f32.gmra.mrb[0].mxu0 %v915
    %v917 = vpop.f32.mrb[0].mxu0
    %v918 = vadd.f32 0.0, %v917
    %v919 = vpop.f32.mrb[0].mxu0
    %920 = vdwg.mxu0
    %921 = vmatprep.subr.mxu0 0.0
    %v922 = vand.u32 %v718, 4294901760
    %v923 = vsub.f32 %v718, %v922
    %v924 = vand.u32 %v923, 4294901760
    %v925 = vsub.f32 %v923, %v924
    %v926 = vand.u32 %v925, 4294901760
    %927 = vmatpush1.msra.mxu0 %v926
    %928 = vmatprep.subr.mxu0 0.0
    %v929 = vand.u32 %v724, 4294901760
    %v930 = vsub.f32 %v724, %v929
    %v931 = vand.u32 %v930, 4294901760
    %v932 = vsub.f32 %v930, %v931
    %v933 = vand.u32 %v932, 4294901760
    %934 = vmatpush1.msra.mxu0 %v933
    %935 = vmatprep.subr.mxu0 0.0
    %v936 = vand.u32 %v730, 4294901760
    %v937 = vsub.f32 %v730, %v936
    %v938 = vand.u32 %v937, 4294901760
    %v939 = vsub.f32 %v937, %v938
    %v940 = vand.u32 %v939, 4294901760
    %941 = vmatpush1.msra.mxu0 %v940
    %942 = vmatprep.subr.mxu0 0.0
    %v943 = vand.u32 %v736, 4294901760
    %v944 = vsub.f32 %v736, %v943
    %v945 = vand.u32 %v944, 4294901760
    %v946 = vsub.f32 %v944, %v945
    %v947 = vand.u32 %v946, 4294901760
    %948 = vmatpush1.msra.mxu0 %v947
    %949 = vmatprep.subr.mxu0 0.0
    %950 = vmatpush1.msra.mxu0 0.0
    %951 = vmatprep.subr.mxu0 0.0
    %952 = vmatpush1.msra.mxu0 0.0
    %953 = vmatprep.subr.mxu0 0.0
    %954 = vmatpush1.msra.mxu0 0.0
    %955 = vmatprep.subr.mxu0 0.0
    %956 = vmatpush1.msra.mxu0 0.0
    %957 = vmatprep.subr.mxu0 0.0
    %958 = vmatpush1.msra.mxu0 0.0
    %959 = vmatprep.subr.mxu0 0.0
    %960 = vmatpush1.msra.mxu0 0.0
    %961 = vmatprep.subr.mxu0 0.0
    %962 = vmatpush1.msra.mxu0 0.0
    %963 = vmatprep.subr.mxu0 0.0
    %964 = vmatpush1.msra.mxu0 0.0
    %965 = vmatprep.subr.mxu0 0.0
    %966 = vmatpush1.msra.mxu0 0.0
    %967 = vmatprep.subr.mxu0 0.0
    %968 = vmatpush1.msra.mxu0 0.0
    %969 = vmatprep.subr.mxu0 0.0
    %970 = vmatpush1.msra.mxu0 0.0
    %971 = vmatprep.subr.mxu0 0.0
    %972 = vmatpush1.msra.mxu0 0.0
    %973 = vmatprep.subr.mxu0 0.0
    %974 = vmatpush1.msra.mxu0 0.0
    %975 = vmatprep.subr.mxu0 0.0
    %976 = vmatpush1.msra.mxu0 0.0
    %977 = vmatprep.subr.mxu0 0.0
    %978 = vmatpush1.msra.mxu0 0.0
    %979 = vmatprep.subr.mxu0 0.0
    %980 = vmatpush1.msra.mxu0 0.0
    %981 = vmatprep.subr.mxu0 0.0
    %982 = vmatpush1.msra.mxu0 0.0
    %983 = vmatprep.subr.mxu0 0.0
    %984 = vmatpush1.msra.mxu0 0.0
    %985 = vmatprep.subr.mxu0 0.0
    %986 = vmatpush1.msra.mxu0 0.0
    %987 = vmatprep.subr.mxu0 0.0
    %988 = vmatpush1.msra.mxu0 0.0
    %989 = vmatprep.subr.mxu0 0.0
    %990 = vmatpush1.msra.mxu0 0.0
    %991 = vmatprep.subr.mxu0 0.0
    %992 = vmatpush1.msra.mxu0 0.0
    %993 = vmatprep.subr.mxu0 0.0
    %994 = vmatpush1.msra.mxu0 0.0
    %995 = vmatprep.subr.mxu0 0.0
    %996 = vmatpush1.msra.mxu0 0.0
    %997 = vmatprep.subr.mxu0 0.0
    %998 = vmatpush1.msra.mxu0 0.0
    %999 = vmatprep.subr.mxu0 0.0
    %1000 = vmatpush1.msra.mxu0 0.0
    %1001 = vmatprep.subr.mxu0 0.0
    %1002 = vmatpush1.msra.mxu0 0.0
    %1003 = vmatprep.subr.mxu0 0.0
    %1004 = vmatpush1.msra.mxu0 0.0
    %1005 = vmatprep.mubr.f32.mxu0 0.0
    %v1006 = vand.u32 %v749, 4294901760
    %1007 = vmatmul.mubr.f32.gmra.mrb[0].mxu0 %v1006
    %v1008 = vpop.f32.mrb[0].mxu0
    %v1009 = vadd.f32 %v848, %v1008
    %v1010 = vpop.f32.mrb[0].mxu0
    %1011 = vmatprep.mubr.f32.mxu0 0.0
    %v1012 = vand.u32 %v752, 4294901760
    %1013 = vmatmul.mubr.f32.gmra.mrb[0].mxu0 %v1012
    %v1014 = vpop.f32.mrb[0].mxu0
    %v1015 = vadd.f32 %v858, %v1014
    %v1016 = vpop.f32.mrb[0].mxu0
    %1017 = vmatprep.mubr.f32.mxu0 0.0
    %v1018 = vand.u32 %v755, 4294901760
    %1019 = vmatmul.mubr.f32.gmra.mrb[0].mxu0 %v1018
    %v1020 = vpop.f32.mrb[0].mxu0
    %v1021 = vadd.f32 %v868, %v1020
    %v1022 = vpop.f32.mrb[0].mxu0
    %1023 = vmatprep.mubr.f32.mxu0 0.0
    %v1024 = vand.u32 %v758, 4294901760
    %1025 = vmatmul.mubr.f32.gmra.mrb[0].mxu0 %v1024
    %v1026 = vpop.f32.mrb[0].mxu0
    %v1027 = vadd.f32 %v878, %v1026
    %v1028 = vpop.f32.mrb[0].mxu0
    %1029 = vmatprep.mubr.f32.mxu0 0.0
    %v1030 = vand.u32 %v761, 4294901760
    %1031 = vmatmul.mubr.f32.gmra.mrb[0].mxu0 %v1030
    %v1032 = vpop.f32.mrb[0].mxu0
    %v1033 = vadd.f32 %v888, %v1032
    %v1034 = vpop.f32.mrb[0].mxu0
    %1035 = vmatprep.mubr.f32.mxu0 0.0
    %v1036 = vand.u32 %v764, 4294901760
    %1037 = vmatmul.mubr.f32.gmra.mrb[0].mxu0 %v1036
    %v1038 = vpop.f32.mrb[0].mxu0
    %v1039 = vadd.f32 %v898, %v1038
    %v1040 = vpop.f32.mrb[0].mxu0
    %1041 = vmatprep.mubr.f32.mxu0 0.0
    %v1042 = vand.u32 %v767, 4294901760
    %1043 = vmatmul.mubr.f32.gmra.mrb[0].mxu0 %v1042
    %v1044 = vpop.f32.mrb[0].mxu0
    %v1045 = vadd.f32 %v908, %v1044
    %v1046 = vpop.f32.mrb[0].mxu0
    %1047 = vmatprep.mubr.f32.mxu0 0.0
    %v1048 = vand.u32 %v770, 4294901760
    %1049 = vmatmul.mubr.f32.gmra.mrb[0].mxu0 %v1048
    %v1050 = vpop.f32.mrb[0].mxu0
    %v1051 = vadd.f32 %v918, %v1050
    %v1052 = vpop.f32.mrb[0].mxu0
    %1053 = vdwg.mxu0
    %1054 = vmatprep.subr.mxu0 0.0
    %v1055 = vand.u32 %v718, 4294901760
    %v1056 = vsub.f32 %v718, %v1055
    %1057 = vmatpush1.msra.mxu0 %v1056
    %1058 = vmatprep.subr.mxu0 0.0
    %v1059 = vand.u32 %v724, 4294901760
    %v1060 = vsub.f32 %v724, %v1059
    %1061 = vmatpush1.msra.mxu0 %v1060
    %1062 = vmatprep.subr.mxu0 0.0
    %v1063 = vand.u32 %v730, 4294901760
    %v1064 = vsub.f32 %v730, %v1063
    %1065 = vmatpush1.msra.mxu0 %v1064
    %1066 = vmatprep.subr.mxu0 0.0
    %v1067 = vand.u32 %v736, 4294901760
    %v1068 = vsub.f32 %v736, %v1067
    %1069 = vmatpush1.msra.mxu0 %v1068
    %1070 = vmatprep.subr.mxu0 0.0
    %1071 = vmatpush1.msra.mxu0 0.0
    %1072 = vmatprep.subr.mxu0 0.0
    %1073 = vmatpush1.msra.mxu0 0.0
    %1074 = vmatprep.subr.mxu0 0.0
    %1075 = vmatpush1.msra.mxu0 0.0
    %1076 = vmatprep.subr.mxu0 0.0
    %1077 = vmatpush1.msra.mxu0 0.0
    %1078 = vmatprep.subr.mxu0 0.0
    %1079 = vmatpush1.msra.mxu0 0.0
    %1080 = vmatprep.subr.mxu0 0.0
    %1081 = vmatpush1.msra.mxu0 0.0
    %1082 = vmatprep.subr.mxu0 0.0
    %1083 = vmatpush1.msra.mxu0 0.0
    %1084 = vmatprep.subr.mxu0 0.0
    %1085 = vmatpush1.msra.mxu0 0.0
    %1086 = vmatprep.subr.mxu0 0.0
    %1087 = vmatpush1.msra.mxu0 0.0
    %1088 = vmatprep.subr.mxu0 0.0
    %1089 = vmatpush1.msra.mxu0 0.0
    %1090 = vmatprep.subr.mxu0 0.0
    %1091 = vmatpush1.msra.mxu0 0.0
    %1092 = vmatprep.subr.mxu0 0.0
    %1093 = vmatpush1.msra.mxu0 0.0
    %1094 = vmatprep.subr.mxu0 0.0
    %1095 = vmatpush1.msra.mxu0 0.0
    %1096 = vmatprep.subr.mxu0 0.0
    %1097 = vmatpush1.msra.mxu0 0.0
    %1098 = vmatprep.subr.mxu0 0.0
    %1099 = vmatpush1.msra.mxu0 0.0
    %1100 = vmatprep.subr.mxu0 0.0
    %1101 = vmatpush1.msra.mxu0 0.0
    %1102 = vmatprep.subr.mxu0 0.0
    %1103 = vmatpush1.msra.mxu0 0.0
    %1104 = vmatprep.subr.mxu0 0.0
    %1105 = vmatpush1.msra.mxu0 0.0
    %1106 = vmatprep.subr.mxu0 0.0
    %1107 = vmatpush1.msra.mxu0 0.0
    %1108 = vmatprep.subr.mxu0 0.0
    %1109 = vmatpush1.msra.mxu0 0.0
    %1110 = vmatprep.subr.mxu0 0.0
    %1111 = vmatpush1.msra.mxu0 0.0
    %1112 = vmatprep.subr.mxu0 0.0
    %1113 = vmatpush1.msra.mxu0 0.0
    %1114 = vmatprep.subr.mxu0 0.0
    %1115 = vmatpush1.msra.mxu0 0.0
    %1116 = vmatprep.subr.mxu0 0.0
    %1117 = vmatpush1.msra.mxu0 0.0
    %1118 = vmatprep.subr.mxu0 0.0
    %1119 = vmatpush1.msra.mxu0 0.0
    %1120 = vmatprep.subr.mxu0 0.0
    %1121 = vmatpush1.msra.mxu0 0.0
    %1122 = vmatprep.subr.mxu0 0.0
    %1123 = vmatpush1.msra.mxu0 0.0
    %1124 = vmatprep.subr.mxu0 0.0
    %1125 = vmatpush1.msra.mxu0 0.0
    %1126 = vmatprep.mubr.f32.mxu0 0.0
    %v1127 = vand.u32 %v749, 4294901760
    %v1128 = vsub.f32 %v749, %v1127
    %1129 = vmatmul.mubr.f32.gmra.mrb[0].mxu0 %v1128
    %v1130 = vpop.f32.mrb[0].mxu0
    %v1131 = vadd.f32 %v1009, %v1130
    %v1132 = vpop.f32.mrb[0].mxu0
    %1133 = vmatprep.mubr.f32.mxu0 0.0
    %v1134 = vand.u32 %v752, 4294901760
    %v1135 = vsub.f32 %v752, %v1134
    %1136 = vmatmul.mubr.f32.gmra.mrb[0].mxu0 %v1135
    %v1137 = vpop.f32.mrb[0].mxu0
    %v1138 = vadd.f32 %v1015, %v1137
    %v1139 = vpop.f32.mrb[0].mxu0
    %1140 = vmatprep.mubr.f32.mxu0 0.0
    %v1141 = vand.u32 %v755, 4294901760
    %v1142 = vsub.f32 %v755, %v1141
    %1143 = vmatmul.mubr.f32.gmra.mrb[0].mxu0 %v1142
    %v1144 = vpop.f32.mrb[0].mxu0
    %v1145 = vadd.f32 %v1021, %v1144
    %v1146 = vpop.f32.mrb[0].mxu0
    %1147 = vmatprep.mubr.f32.mxu0 0.0
    %v1148 = vand.u32 %v758, 4294901760
    %v1149 = vsub.f32 %v758, %v1148
    %1150 = vmatmul.mubr.f32.gmra.mrb[0].mxu0 %v1149
    %v1151 = vpop.f32.mrb[0].mxu0
    %v1152 = vadd.f32 %v1027, %v1151
    %v1153 = vpop.f32.mrb[0].mxu0
    %1154 = vmatprep.mubr.f32.mxu0 0.0
    %v1155 = vand.u32 %v761, 4294901760
    %v1156 = vsub.f32 %v761, %v1155
    %1157 = vmatmul.mubr.f32.gmra.mrb[0].mxu0 %v1156
    %v1158 = vpop.f32.mrb[0].mxu0
    %v1159 = vadd.f32 %v1033, %v1158
    %v1160 = vpop.f32.mrb[0].mxu0
    %1161 = vmatprep.mubr.f32.mxu0 0.0
    %v1162 = vand.u32 %v764, 4294901760
    %v1163 = vsub.f32 %v764, %v1162
    %1164 = vmatmul.mubr.f32.gmra.mrb[0].mxu0 %v1163
    %v1165 = vpop.f32.mrb[0].mxu0
    %v1166 = vadd.f32 %v1039, %v1165
    %v1167 = vpop.f32.mrb[0].mxu0
    %1168 = vmatprep.mubr.f32.mxu0 0.0
    %v1169 = vand.u32 %v767, 4294901760
    %v1170 = vsub.f32 %v767, %v1169
    %1171 = vmatmul.mubr.f32.gmra.mrb[0].mxu0 %v1170
    %v1172 = vpop.f32.mrb[0].mxu0
    %v1173 = vadd.f32 %v1045, %v1172
    %v1174 = vpop.f32.mrb[0].mxu0
    %1175 = vmatprep.mubr.f32.mxu0 0.0
    %v1176 = vand.u32 %v770, 4294901760
    %v1177 = vsub.f32 %v770, %v1176
    %1178 = vmatmul.mubr.f32.gmra.mrb[0].mxu0 %v1177
    %v1179 = vpop.f32.mrb[0].mxu0
    %v1180 = vadd.f32 %v1051, %v1179
    %v1181 = vpop.f32.mrb[0].mxu0
    %1182 = vdwg.mxu0
    %1183 = vmatprep.subr.mxu0 0.0
    %v1184 = vand.u32 %v718, 4294901760
    %1185 = vmatpush1.msra.mxu0 %v1184
    %1186 = vmatprep.subr.mxu0 0.0
    %v1187 = vand.u32 %v724, 4294901760
    %1188 = vmatpush1.msra.mxu0 %v1187
    %1189 = vmatprep.subr.mxu0 0.0
    %v1190 = vand.u32 %v730, 4294901760
    %1191 = vmatpush1.msra.mxu0 %v1190
    %1192 = vmatprep.subr.mxu0 0.0
    %v1193 = vand.u32 %v736, 4294901760
    %1194 = vmatpush1.msra.mxu0 %v1193
    %1195 = vmatprep.subr.mxu0 0.0
    %1196 = vmatpush1.msra.mxu0 0.0
    %1197 = vmatprep.subr.mxu0 0.0
    %1198 = vmatpush1.msra.mxu0 0.0
    %1199 = vmatprep.subr.mxu0 0.0
    %1200 = vmatpush1.msra.mxu0 0.0
    %1201 = vmatprep.subr.mxu0 0.0
    %1202 = vmatpush1.msra.mxu0 0.0
    %1203 = vmatprep.subr.mxu0 0.0
    %1204 = vmatpush1.msra.mxu0 0.0
    %1205 = vmatprep.subr.mxu0 0.0
    %1206 = vmatpush1.msra.mxu0 0.0
    %1207 = vmatprep.subr.mxu0 0.0
    %1208 = vmatpush1.msra.mxu0 0.0
    %1209 = vmatprep.subr.mxu0 0.0
    %1210 = vmatpush1.msra.mxu0 0.0
    %1211 = vmatprep.subr.mxu0 0.0
    %1212 = vmatpush1.msra.mxu0 0.0
    %1213 = vmatprep.subr.mxu0 0.0
    %1214 = vmatpush1.msra.mxu0 0.0
    %1215 = vmatprep.subr.mxu0 0.0
    %1216 = vmatpush1.msra.mxu0 0.0
    %1217 = vmatprep.subr.mxu0 0.0
    %1218 = vmatpush1.msra.mxu0 0.0
    %1219 = vmatprep.subr.mxu0 0.0
    %1220 = vmatpush1.msra.mxu0 0.0
    %1221 = vmatprep.subr.mxu0 0.0
    %1222 = vmatpush1.msra.mxu0 0.0
    %1223 = vmatprep.subr.mxu0 0.0
    %1224 = vmatpush1.msra.mxu0 0.0
    %1225 = vmatprep.subr.mxu0 0.0
    %1226 = vmatpush1.msra.mxu0 0.0
    %1227 = vmatprep.subr.mxu0 0.0
    %1228 = vmatpush1.msra.mxu0 0.0
    %1229 = vmatprep.subr.mxu0 0.0
    %1230 = vmatpush1.msra.mxu0 0.0
    %1231 = vmatprep.subr.mxu0 0.0
    %1232 = vmatpush1.msra.mxu0 0.0
    %1233 = vmatprep.subr.mxu0 0.0
    %1234 = vmatpush1.msra.mxu0 0.0
    %1235 = vmatprep.subr.mxu0 0.0
    %1236 = vmatpush1.msra.mxu0 0.0
    %1237 = vmatprep.subr.mxu0 0.0
    %1238 = vmatpush1.msra.mxu0 0.0
    %1239 = vmatprep.subr.mxu0 0.0
    %1240 = vmatpush1.msra.mxu0 0.0
    %1241 = vmatprep.subr.mxu0 0.0
    %1242 = vmatpush1.msra.mxu0 0.0
    %1243 = vmatprep.subr.mxu0 0.0
    %1244 = vmatpush1.msra.mxu0 0.0
    %1245 = vmatprep.subr.mxu0 0.0
    %1246 = vmatpush1.msra.mxu0 0.0
    %1247 = vmatprep.subr.mxu0 0.0
    %1248 = vmatpush1.msra.mxu0 0.0
    %1249 = vmatprep.subr.mxu0 0.0
    %1250 = vmatpush1.msra.mxu0 0.0
    %1251 = vmatprep.mubr.f32.mxu0 0.0
    %v1252 = vand.u32 %v749, 4294901760
    %v1253 = vsub.f32 %v749, %v1252
    %v1254 = vand.u32 %v1253, 4294901760
    %1255 = vmatmul.mubr.f32.gmra.mrb[0].mxu0 %v1254
    %v1256 = vpop.f32.mrb[0].mxu0
    %v1257 = vadd.f32 %v1131, %v1256
    %v1258 = vpop.f32.mrb[0].mxu0
    %1259 = vmatprep.mubr.f32.mxu0 0.0
    %v1260 = vand.u32 %v752, 4294901760
    %v1261 = vsub.f32 %v752, %v1260
    %v1262 = vand.u32 %v1261, 4294901760
    %1263 = vmatmul.mubr.f32.gmra.mrb[0].mxu0 %v1262
    %v1264 = vpop.f32.mrb[0].mxu0
    %v1265 = vadd.f32 %v1138, %v1264
    %v1266 = vpop.f32.mrb[0].mxu0
    %1267 = vmatprep.mubr.f32.mxu0 0.0
    %v1268 = vand.u32 %v755, 4294901760
    %v1269 = vsub.f32 %v755, %v1268
    %v1270 = vand.u32 %v1269, 4294901760
    %1271 = vmatmul.mubr.f32.gmra.mrb[0].mxu0 %v1270
    %v1272 = vpop.f32.mrb[0].mxu0
    %v1273 = vadd.f32 %v1145, %v1272
    %v1274 = vpop.f32.mrb[0].mxu0
    %1275 = vmatprep.mubr.f32.mxu0 0.0
    %v1276 = vand.u32 %v758, 4294901760
    %v1277 = vsub.f32 %v758, %v1276
    %v1278 = vand.u32 %v1277, 4294901760
    %1279 = vmatmul.mubr.f32.gmra.mrb[0].mxu0 %v1278
    %v1280 = vpop.f32.mrb[0].mxu0
    %v1281 = vadd.f32 %v1152, %v1280
    %v1282 = vpop.f32.mrb[0].mxu0
    %1283 = vmatprep.mubr.f32.mxu0 0.0
    %v1284 = vand.u32 %v761, 4294901760
    %v1285 = vsub.f32 %v761, %v1284
    %v1286 = vand.u32 %v1285, 4294901760
    %1287 = vmatmul.mubr.f32.gmra.mrb[0].mxu0 %v1286
    %v1288 = vpop.f32.mrb[0].mxu0
    %v1289 = vadd.f32 %v1159, %v1288
    %v1290 = vpop.f32.mrb[0].mxu0
    %1291 = vmatprep.mubr.f32.mxu0 0.0
    %v1292 = vand.u32 %v764, 4294901760
    %v1293 = vsub.f32 %v764, %v1292
    %v1294 = vand.u32 %v1293, 4294901760
    %1295 = vmatmul.mubr.f32.gmra.mrb[0].mxu0 %v1294
    %v1296 = vpop.f32.mrb[0].mxu0
    %v1297 = vadd.f32 %v1166, %v1296
    %v1298 = vpop.f32.mrb[0].mxu0
    %1299 = vmatprep.mubr.f32.mxu0 0.0
    %v1300 = vand.u32 %v767, 4294901760
    %v1301 = vsub.f32 %v767, %v1300
    %v1302 = vand.u32 %v1301, 4294901760
    %1303 = vmatmul.mubr.f32.gmra.mrb[0].mxu0 %v1302
    %v1304 = vpop.f32.mrb[0].mxu0
    %v1305 = vadd.f32 %v1173, %v1304
    %v1306 = vpop.f32.mrb[0].mxu0
    %1307 = vmatprep.mubr.f32.mxu0 0.0
    %v1308 = vand.u32 %v770, 4294901760
    %v1309 = vsub.f32 %v770, %v1308
    %v1310 = vand.u32 %v1309, 4294901760
    %1311 = vmatmul.mubr.f32.gmra.mrb[0].mxu0 %v1310
    %v1312 = vpop.f32.mrb[0].mxu0
    %v1313 = vadd.f32 %v1180, %v1312
    %v1314 = vpop.f32.mrb[0].mxu0
    %1315 = vdwg.mxu0
    %1316 = vmatprep.subr.mxu0 0.0
    %v1317 = vand.u32 %v718, 4294901760
    %v1318 = vsub.f32 %v718, %v1317
    %v1319 = vand.u32 %v1318, 4294901760
    %1320 = vmatpush1.msra.mxu0 %v1319
    %1321 = vmatprep.subr.mxu0 0.0
    %v1322 = vand.u32 %v724, 4294901760
    %v1323 = vsub.f32 %v724, %v1322
    %v1324 = vand.u32 %v1323, 4294901760
    %1325 = vmatpush1.msra.mxu0 %v1324
    %1326 = vmatprep.subr.mxu0 0.0
    %v1327 = vand.u32 %v730, 4294901760
    %v1328 = vsub.f32 %v730, %v1327
    %v1329 = vand.u32 %v1328, 4294901760
    %1330 = vmatpush1.msra.mxu0 %v1329
    %1331 = vmatprep.subr.mxu0 0.0
    %v1332 = vand.u32 %v736, 4294901760
    %v1333 = vsub.f32 %v736, %v1332
    %v1334 = vand.u32 %v1333, 4294901760
    %1335 = vmatpush1.msra.mxu0 %v1334
    %1336 = vmatprep.subr.mxu0 0.0
    %1337 = vmatpush1.msra.mxu0 0.0
    %1338 = vmatprep.subr.mxu0 0.0
    %1339 = vmatpush1.msra.mxu0 0.0
    %1340 = vmatprep.subr.mxu0 0.0
    %1341 = vmatpush1.msra.mxu0 0.0
    %1342 = vmatprep.subr.mxu0 0.0
    %1343 = vmatpush1.msra.mxu0 0.0
    %1344 = vmatprep.subr.mxu0 0.0
    %1345 = vmatpush1.msra.mxu0 0.0
    %1346 = vmatprep.subr.mxu0 0.0
    %1347 = vmatpush1.msra.mxu0 0.0
    %1348 = vmatprep.subr.mxu0 0.0
    %1349 = vmatpush1.msra.mxu0 0.0
    %1350 = vmatprep.subr.mxu0 0.0
    %1351 = vmatpush1.msra.mxu0 0.0
    %1352 = vmatprep.subr.mxu0 0.0
    %1353 = vmatpush1.msra.mxu0 0.0
    %1354 = vmatprep.subr.mxu0 0.0
    %1355 = vmatpush1.msra.mxu0 0.0
    %1356 = vmatprep.subr.mxu0 0.0
    %1357 = vmatpush1.msra.mxu0 0.0
    %1358 = vmatprep.subr.mxu0 0.0
    %1359 = vmatpush1.msra.mxu0 0.0
    %1360 = vmatprep.subr.mxu0 0.0
    %1361 = vmatpush1.msra.mxu0 0.0
    %1362 = vmatprep.subr.mxu0 0.0
    %1363 = vmatpush1.msra.mxu0 0.0
    %1364 = vmatprep.subr.mxu0 0.0
    %1365 = vmatpush1.msra.mxu0 0.0
    %1366 = vmatprep.subr.mxu0 0.0
    %1367 = vmatpush1.msra.mxu0 0.0
    %1368 = vmatprep.subr.mxu0 0.0
    %1369 = vmatpush1.msra.mxu0 0.0
    %1370 = vmatprep.subr.mxu0 0.0
    %1371 = vmatpush1.msra.mxu0 0.0
    %1372 = vmatprep.subr.mxu0 0.0
    %1373 = vmatpush1.msra.mxu0 0.0
    %1374 = vmatprep.subr.mxu0 0.0
    %1375 = vmatpush1.msra.mxu0 0.0
    %1376 = vmatprep.subr.mxu0 0.0
    %1377 = vmatpush1.msra.mxu0 0.0
    %1378 = vmatprep.subr.mxu0 0.0
    %1379 = vmatpush1.msra.mxu0 0.0
    %1380 = vmatprep.subr.mxu0 0.0
    %1381 = vmatpush1.msra.mxu0 0.0
    %1382 = vmatprep.subr.mxu0 0.0
    %1383 = vmatpush1.msra.mxu0 0.0
    %1384 = vmatprep.subr.mxu0 0.0
    %1385 = vmatpush1.msra.mxu0 0.0
    %1386 = vmatprep.subr.mxu0 0.0
    %1387 = vmatpush1.msra.mxu0 0.0
    %1388 = vmatprep.subr.mxu0 0.0
    %1389 = vmatpush1.msra.mxu0 0.0
    %1390 = vmatprep.subr.mxu0 0.0
    %1391 = vmatpush1.msra.mxu0 0.0
    %1392 = vmatprep.mubr.f32.mxu0 0.0
    %v1393 = vand.u32 %v749, 4294901760
    %1394 = vmatmul.mubr.f32.gmra.mrb[0].mxu0 %v1393
    %v1395 = vpop.f32.mrb[0].mxu0
    %v1396 = vadd.f32 %v1257, %v1395
    %v1397 = vpop.f32.mrb[0].mxu0
    %1398 = vmatprep.mubr.f32.mxu0 0.0
    %v1399 = vand.u32 %v752, 4294901760
    %1400 = vmatmul.mubr.f32.gmra.mrb[0].mxu0 %v1399
    %v1401 = vpop.f32.mrb[0].mxu0
    %v1402 = vadd.f32 %v1265, %v1401
    %v1403 = vpop.f32.mrb[0].mxu0
    %1404 = vmatprep.mubr.f32.mxu0 0.0
    %v1405 = vand.u32 %v755, 4294901760
    %1406 = vmatmul.mubr.f32.gmra.mrb[0].mxu0 %v1405
    %v1407 = vpop.f32.mrb[0].mxu0
    %v1408 = vadd.f32 %v1273, %v1407
    %v1409 = vpop.f32.mrb[0].mxu0
    %1410 = vmatprep.mubr.f32.mxu0 0.0
    %v1411 = vand.u32 %v758, 4294901760
    %1412 = vmatmul.mubr.f32.gmra.mrb[0].mxu0 %v1411
    %v1413 = vpop.f32.mrb[0].mxu0
    %v1414 = vadd.f32 %v1281, %v1413
    %v1415 = vpop.f32.mrb[0].mxu0
    %1416 = vmatprep.mubr.f32.mxu0 0.0
    %v1417 = vand.u32 %v761, 4294901760
    %1418 = vmatmul.mubr.f32.gmra.mrb[0].mxu0 %v1417
    %v1419 = vpop.f32.mrb[0].mxu0
    %v1420 = vadd.f32 %v1289, %v1419
    %v1421 = vpop.f32.mrb[0].mxu0
    %1422 = vmatprep.mubr.f32.mxu0 0.0
    %v1423 = vand.u32 %v764, 4294901760
    %1424 = vmatmul.mubr.f32.gmra.mrb[0].mxu0 %v1423
    %v1425 = vpop.f32.mrb[0].mxu0
    %v1426 = vadd.f32 %v1297, %v1425
    %v1427 = vpop.f32.mrb[0].mxu0
    %1428 = vmatprep.mubr.f32.mxu0 0.0
    %v1429 = vand.u32 %v767, 4294901760
    %1430 = vmatmul.mubr.f32.gmra.mrb[0].mxu0 %v1429
    %v1431 = vpop.f32.mrb[0].mxu0
    %v1432 = vadd.f32 %v1305, %v1431
    %v1433 = vpop.f32.mrb[0].mxu0
    %1434 = vmatprep.mubr.f32.mxu0 0.0
    %v1435 = vand.u32 %v770, 4294901760
    %1436 = vmatmul.mubr.f32.gmra.mrb[0].mxu0 %v1435
    %v1437 = vpop.f32.mrb[0].mxu0
    %v1438 = vadd.f32 %v1313, %v1437
    %v1439 = vpop.f32.mrb[0].mxu0
    %1440 = vdwg.mxu0
    %1441 = vmatprep.subr.mxu0 0.0
    %v1442 = vand.u32 %v718, 4294901760
    %1443 = vmatpush1.msra.mxu0 %v1442
    %1444 = vmatprep.subr.mxu0 0.0
    %v1445 = vand.u32 %v724, 4294901760
    %1446 = vmatpush1.msra.mxu0 %v1445
    %1447 = vmatprep.subr.mxu0 0.0
    %v1448 = vand.u32 %v730, 4294901760
    %1449 = vmatpush1.msra.mxu0 %v1448
    %1450 = vmatprep.subr.mxu0 0.0
    %v1451 = vand.u32 %v736, 4294901760
    %1452 = vmatpush1.msra.mxu0 %v1451
    %1453 = vmatprep.subr.mxu0 0.0
    %1454 = vmatpush1.msra.mxu0 0.0
    %1455 = vmatprep.subr.mxu0 0.0
    %1456 = vmatpush1.msra.mxu0 0.0
    %1457 = vmatprep.subr.mxu0 0.0
    %1458 = vmatpush1.msra.mxu0 0.0
    %1459 = vmatprep.subr.mxu0 0.0
    %1460 = vmatpush1.msra.mxu0 0.0
    %1461 = vmatprep.subr.mxu0 0.0
    %1462 = vmatpush1.msra.mxu0 0.0
    %1463 = vmatprep.subr.mxu0 0.0
    %1464 = vmatpush1.msra.mxu0 0.0
    %1465 = vmatprep.subr.mxu0 0.0
    %1466 = vmatpush1.msra.mxu0 0.0
    %1467 = vmatprep.subr.mxu0 0.0
    %1468 = vmatpush1.msra.mxu0 0.0
    %1469 = vmatprep.subr.mxu0 0.0
    %1470 = vmatpush1.msra.mxu0 0.0
    %1471 = vmatprep.subr.mxu0 0.0
    %1472 = vmatpush1.msra.mxu0 0.0
    %1473 = vmatprep.subr.mxu0 0.0
    %1474 = vmatpush1.msra.mxu0 0.0
    %1475 = vmatprep.subr.mxu0 0.0
    %1476 = vmatpush1.msra.mxu0 0.0
    %1477 = vmatprep.subr.mxu0 0.0
    %1478 = vmatpush1.msra.mxu0 0.0
    %1479 = vmatprep.subr.mxu0 0.0
    %1480 = vmatpush1.msra.mxu0 0.0
    %1481 = vmatprep.subr.mxu0 0.0
    %1482 = vmatpush1.msra.mxu0 0.0
    %1483 = vmatprep.subr.mxu0 0.0
    %1484 = vmatpush1.msra.mxu0 0.0
    %1485 = vmatprep.subr.mxu0 0.0
    %1486 = vmatpush1.msra.mxu0 0.0
    %1487 = vmatprep.subr.mxu0 0.0
    %1488 = vmatpush1.msra.mxu0 0.0
    %1489 = vmatprep.subr.mxu0 0.0
    %1490 = vmatpush1.msra.mxu0 0.0
    %1491 = vmatprep.subr.mxu0 0.0
    %1492 = vmatpush1.msra.mxu0 0.0
    %1493 = vmatprep.subr.mxu0 0.0
    %1494 = vmatpush1.msra.mxu0 0.0
    %1495 = vmatprep.subr.mxu0 0.0
    %1496 = vmatpush1.msra.mxu0 0.0
    %1497 = vmatprep.subr.mxu0 0.0
    %1498 = vmatpush1.msra.mxu0 0.0
    %1499 = vmatprep.subr.mxu0 0.0
    %1500 = vmatpush1.msra.mxu0 0.0
    %1501 = vmatprep.subr.mxu0 0.0
    %1502 = vmatpush1.msra.mxu0 0.0
    %1503 = vmatprep.subr.mxu0 0.0
    %1504 = vmatpush1.msra.mxu0 0.0
    %1505 = vmatprep.subr.mxu0 0.0
    %1506 = vmatpush1.msra.mxu0 0.0
    %1507 = vmatprep.subr.mxu0 0.0
    %1508 = vmatpush1.msra.mxu0 0.0
    %1509 = vmatprep.mubr.f32.mxu0 0.0
    %v1510 = vand.u32 %v749, 4294901760
    %1511 = vmatmul.mubr.f32.gmra.mrb[0].mxu0 %v1510
    %v1512 = vpop.f32.mrb[0].mxu0
    %v1513 = vadd.f32 %v1396, %v1512
    %v1514 = vpop.f32.mrb[0].mxu0
    %1515 = vmatprep.mubr.f32.mxu0 0.0
    %v1516 = vand.u32 %v752, 4294901760
    %1517 = vmatmul.mubr.f32.gmra.mrb[0].mxu0 %v1516
    %v1518 = vpop.f32.mrb[0].mxu0
    %v1519 = vadd.f32 %v1402, %v1518
    %v1520 = vpop.f32.mrb[0].mxu0
    %1521 = vmatprep.mubr.f32.mxu0 0.0
    %v1522 = vand.u32 %v755, 4294901760
    %1523 = vmatmul.mubr.f32.gmra.mrb[0].mxu0 %v1522
    %v1524 = vpop.f32.mrb[0].mxu0
    %v1525 = vadd.f32 %v1408, %v1524
    %v1526 = vpop.f32.mrb[0].mxu0
    %1527 = vmatprep.mubr.f32.mxu0 0.0
    %v1528 = vand.u32 %v758, 4294901760
    %1529 = vmatmul.mubr.f32.gmra.mrb[0].mxu0 %v1528
    %v1530 = vpop.f32.mrb[0].mxu0
    %v1531 = vadd.f32 %v1414, %v1530
    %v1532 = vpop.f32.mrb[0].mxu0
    %1533 = vmatprep.mubr.f32.mxu0 0.0
    %v1534 = vand.u32 %v761, 4294901760
    %1535 = vmatmul.mubr.f32.gmra.mrb[0].mxu0 %v1534
    %v1536 = vpop.f32.mrb[0].mxu0
    %v1537 = vadd.f32 %v1420, %v1536
    %v1538 = vpop.f32.mrb[0].mxu0
    %1539 = vmatprep.mubr.f32.mxu0 0.0
    %v1540 = vand.u32 %v764, 4294901760
    %1541 = vmatmul.mubr.f32.gmra.mrb[0].mxu0 %v1540
    %v1542 = vpop.f32.mrb[0].mxu0
    %v1543 = vadd.f32 %v1426, %v1542
    %v1544 = vpop.f32.mrb[0].mxu0
    %1545 = vmatprep.mubr.f32.mxu0 0.0
    %v1546 = vand.u32 %v767, 4294901760
    %1547 = vmatmul.mubr.f32.gmra.mrb[0].mxu0 %v1546
    %v1548 = vpop.f32.mrb[0].mxu0
    %v1549 = vadd.f32 %v1432, %v1548
    %v1550 = vpop.f32.mrb[0].mxu0
    %1551 = vmatprep.mubr.f32.mxu0 0.0
    %v1552 = vand.u32 %v770, 4294901760
    %1553 = vmatmul.mubr.f32.gmra.mrb[0].mxu0 %v1552
    %v1554 = vpop.f32.mrb[0].mxu0
    %v1555 = vadd.f32 %v1438, %v1554
    %v1556 = vpop.f32.mrb[0].mxu0
    %1557 = vdwg.mxu0
    %v1558 = vmin.f32 %v1513, 0.0
    %v1559 = vmin.f32 %v1519, 0.0
    %v1560 = vmin.f32 %v1525, 0.0
    %v1561 = vmin.f32 %v1531, 0.0
    %v1562 = vmin.f32 %v1537, 0.0
    %v1563 = vmin.f32 %v1543, 0.0
    %v1564 = vmin.f32 %v1549, 0.0
    %v1565 = vmin.f32 %v1555, 0.0
    %v1566 = vand.u32 2147483647, %v1513
    %v1567 = vand.u32 2147483647, %v1519
    %v1568 = vand.u32 2147483647, %v1525
    %v1569 = vand.u32 2147483647, %v1531
    %v1570 = vand.u32 2147483647, %v1537
    %v1571 = vand.u32 2147483647, %v1543
    %v1572 = vand.u32 2147483647, %v1549
    %v1573 = vand.u32 2147483647, %v1555
    %v1574 = vsub.f32 0.0, %v1566
    %v1575 = vsub.f32 0.0, %v1567
    %v1576 = vsub.f32 0.0, %v1568
    %v1577 = vsub.f32 0.0, %v1569
    %v1578 = vsub.f32 0.0, %v1570
    %v1579 = vsub.f32 0.0, %v1571
    %v1580 = vsub.f32 0.0, %v1572
    %v1581 = vsub.f32 0.0, %v1573
    %v1582 = vmul.f32 %v1574, 1.442695
    %v1583 = vpow.pop %v1582
    %v1584 = vmul.f32 %v1575, 1.442695
    %v1585 = vpow.pop %v1584
    %v1586 = vmul.f32 %v1576, 1.442695
    %v1587 = vpow.pop %v1586
    %v1588 = vmul.f32 %v1577, 1.442695
    %v1589 = vpow.pop %v1588
    %v1590 = vmul.f32 %v1578, 1.442695
    %v1591 = vpow.pop %v1590
    %v1592 = vmul.f32 %v1579, 1.442695
    %v1593 = vpow.pop %v1592
    %v1594 = vmul.f32 %v1580, 1.442695
    %v1595 = vpow.pop %v1594
    %v1596 = vmul.f32 %v1581, 1.442695
    %v1597 = vpow.pop %v1596
    %v1598 = vadd.f32 %v1583, 1.0
    %v1599 = vlog2.pop %v1598
    %v1600 = vmul.f32 %v1599, 0.6931472
    %v1601 = vmul.f32 -0.5, %v1583
    %v1602 = vadd.f32 %v1601, 1.0
    %v1603 = vmul.f32 %v1602, %v1583
    %v1604 = vand.u32 2147483647, %v1583
    %vm1605 = vcmp.lt.f32.partialorder %v1604, 0.0004427343
    %v1606 = vsel %vm1605, %v1603, %v1600
    %v1607 = vadd.f32 %v1585, 1.0
    %v1608 = vlog2.pop %v1607
    %v1609 = vmul.f32 %v1608, 0.6931472
    %v1610 = vmul.f32 -0.5, %v1585
    %v1611 = vadd.f32 %v1610, 1.0
    %v1612 = vmul.f32 %v1611, %v1585
    %v1613 = vand.u32 2147483647, %v1585
    %vm1614 = vcmp.lt.f32.partialorder %v1613, 0.0004427343
    %v1615 = vsel %vm1614, %v1612, %v1609
    %v1616 = vadd.f32 %v1587, 1.0
    %v1617 = vlog2.pop %v1616
    %v1618 = vmul.f32 %v1617, 0.6931472
    %v1619 = vmul.f32 -0.5, %v1587
    %v1620 = vadd.f32 %v1619, 1.0
    %v1621 = vmul.f32 %v1620, %v1587
    %v1622 = vand.u32 2147483647, %v1587
    %vm1623 = vcmp.lt.f32.partialorder %v1622, 0.0004427343
    %v1624 = vsel %vm1623, %v1621, %v1618
    %v1625 = vadd.f32 %v1589, 1.0
    %v1626 = vlog2.pop %v1625
    %v1627 = vmul.f32 %v1626, 0.6931472
    %v1628 = vmul.f32 -0.5, %v1589
    %v1629 = vadd.f32 %v1628, 1.0
    %v1630 = vmul.f32 %v1629, %v1589
    %v1631 = vand.u32 2147483647, %v1589
    %vm1632 = vcmp.lt.f32.partialorder %v1631, 0.0004427343
    %v1633 = vsel %vm1632, %v1630, %v1627
    %v1634 = vadd.f32 %v1591, 1.0
    %v1635 = vlog2.pop %v1634
    %v1636 = vmul.f32 %v1635, 0.6931472
    %v1637 = vmul.f32 -0.5, %v1591
    %v1638 = vadd.f32 %v1637, 1.0
    %v1639 = vmul.f32 %v1638, %v1591
    %v1640 = vand.u32 2147483647, %v1591
    %vm1641 = vcmp.lt.f32.partialorder %v1640, 0.0004427343
    %v1642 = vsel %vm1641, %v1639, %v1636
    %v1643 = vadd.f32 %v1593, 1.0
    %v1644 = vlog2.pop %v1643
    %v1645 = vmul.f32 %v1644, 0.6931472
    %v1646 = vmul.f32 -0.5, %v1593
    %v1647 = vadd.f32 %v1646, 1.0
    %v1648 = vmul.f32 %v1647, %v1593
    %v1649 = vand.u32 2147483647, %v1593
    %vm1650 = vcmp.lt.f32.partialorder %v1649, 0.0004427343
    %v1651 = vsel %vm1650, %v1648, %v1645
    %v1652 = vadd.f32 %v1595, 1.0
    %v1653 = vlog2.pop %v1652
    %v1654 = vmul.f32 %v1653, 0.6931472
    %v1655 = vmul.f32 -0.5, %v1595
    %v1656 = vadd.f32 %v1655, 1.0
    %v1657 = vmul.f32 %v1656, %v1595
    %v1658 = vand.u32 2147483647, %v1595
    %vm1659 = vcmp.lt.f32.partialorder %v1658, 0.0004427343
    %v1660 = vsel %vm1659, %v1657, %v1654
    %v1661 = vadd.f32 %v1597, 1.0
    %v1662 = vlog2.pop %v1661
    %v1663 = vmul.f32 %v1662, 0.6931472
    %v1664 = vmul.f32 -0.5, %v1597
    %v1665 = vadd.f32 %v1664, 1.0
    %v1666 = vmul.f32 %v1665, %v1597
    %v1667 = vand.u32 2147483647, %v1597
    %vm1668 = vcmp.lt.f32.partialorder %v1667, 0.0004427343
    %v1669 = vsel %vm1668, %v1666, %v1663
    %v1670 = vsub.f32 %v1558, %v1606
    %v1671 = vsub.f32 %v1559, %v1615
    %v1672 = vsub.f32 %v1560, %v1624
    %v1673 = vsub.f32 %v1561, %v1633
    %v1674 = vsub.f32 %v1562, %v1642
    %v1675 = vsub.f32 %v1563, %v1651
    %v1676 = vsub.f32 %v1564, %v1660
    %v1677 = vsub.f32 %v1565, %v1669
    %v1678 = vld [vmem:[%s1] sm:$0x1]
    %v1679 = vlaneseq
    %v1680 = vshrl.u32 %v1679, 7
    %v1681 = vsub.s32 0, %v1680
    %v1682 = vrot.slane %v1678, %v1681
    %vm1683 = vcmp.eq.s32.totalorder %v1682, %v19
    %vm1684 = vcmp.eq.s32.totalorder %v1682, %v20
    %vm1685 = vcmp.eq.s32.totalorder %v1682, %v21
    %vm1686 = vcmp.eq.s32.totalorder %v1682, %v22
    %vm1687 = vcmp.eq.s32.totalorder %v1682, %v23
    %vm1688 = vcmp.eq.s32.totalorder %v1682, %v24
    %vm1689 = vcmp.eq.s32.totalorder %v1682, %v25
    %vm1690 = vcmp.eq.s32.totalorder %v1682, %v26
    %v1691 = vsel %vm1683, 1, 0
    %v1692 = vsel %vm1684, 1, 0
    %v1693 = vsel %vm1685, 1, 0
    %v1694 = vsel %vm1686, 1, 0
    %v1695 = vsel %vm1687, 1, 0
    %v1696 = vsel %vm1688, 1, 0
    %v1697 = vsel %vm1689, 1, 0
    %v1698 = vsel %vm1690, 1, 0
    %v1699 = vcvt.s32.f32 %v1691
    %v1700 = vcvt.s32.f32 %v1692
    %v1701 = vcvt.s32.f32 %v1693
    %v1702 = vcvt.s32.f32 %v1694
    %v1703 = vcvt.s32.f32 %v1695
    %v1704 = vcvt.s32.f32 %v1696
    %v1705 = vcvt.s32.f32 %v1697
    %v1706 = vcvt.s32.f32 %v1698
    %v1707 = vadd.f32 %v1699, 0.0
    %v1708 = vadd.f32 %v1700, 0.0
    %v1709 = vadd.f32 %v1701, 0.0
    %v1710 = vadd.f32 %v1702, 0.0
    %v1711 = vadd.f32 %v1703, 0.0
    %v1712 = vadd.f32 %v1704, 0.0
    %v1713 = vadd.f32 %v1705, 0.0
    %v1714 = vadd.f32 %v1706, 0.0
    %v1715 = vld [vmem:[%s1 + $0x1] sm:$0x1]
    %v1716 = vlaneseq
    %v1717 = vshrl.u32 %v1716, 7
    %v1718 = vsub.s32 0, %v1717
    %v1719 = vrot.slane %v1715, %v1718
    %vm1720 = vcmp.eq.s32.totalorder %v1719, %v19
    %vm1721 = vcmp.eq.s32.totalorder %v1719, %v20
    %vm1722 = vcmp.eq.s32.totalorder %v1719, %v21
    %vm1723 = vcmp.eq.s32.totalorder %v1719, %v22
    %vm1724 = vcmp.eq.s32.totalorder %v1719, %v23
    %vm1725 = vcmp.eq.s32.totalorder %v1719, %v24
    %vm1726 = vcmp.eq.s32.totalorder %v1719, %v25
    %vm1727 = vcmp.eq.s32.totalorder %v1719, %v26
    %v1728 = vsel %vm1720, 1, 0
    %v1729 = vsel %vm1721, 1, 0
    %v1730 = vsel %vm1722, 1, 0
    %v1731 = vsel %vm1723, 1, 0
    %v1732 = vsel %vm1724, 1, 0
    %v1733 = vsel %vm1725, 1, 0
    %v1734 = vsel %vm1726, 1, 0
    %v1735 = vsel %vm1727, 1, 0
    %v1736 = vcvt.s32.f32 %v1728
    %v1737 = vcvt.s32.f32 %v1729
    %v1738 = vcvt.s32.f32 %v1730
    %v1739 = vcvt.s32.f32 %v1731
    %v1740 = vcvt.s32.f32 %v1732
    %v1741 = vcvt.s32.f32 %v1733
    %v1742 = vcvt.s32.f32 %v1734
    %v1743 = vcvt.s32.f32 %v1735
    %v1744 = vadd.f32 %v1707, %v1736
    %v1745 = vadd.f32 %v1708, %v1737
    %v1746 = vadd.f32 %v1709, %v1738
    %v1747 = vadd.f32 %v1710, %v1739
    %v1748 = vadd.f32 %v1711, %v1740
    %v1749 = vadd.f32 %v1712, %v1741
    %v1750 = vadd.f32 %v1713, %v1742
    %v1751 = vadd.f32 %v1714, %v1743
    %v1752 = vld [vmem:[%s1 + $0x2] sm:$0x1]
    %v1753 = vlaneseq
    %v1754 = vshrl.u32 %v1753, 7
    %v1755 = vsub.s32 0, %v1754
    %v1756 = vrot.slane %v1752, %v1755
    %vm1757 = vcmp.eq.s32.totalorder %v1756, %v19
    %vm1758 = vcmp.eq.s32.totalorder %v1756, %v20
    %vm1759 = vcmp.eq.s32.totalorder %v1756, %v21
    %vm1760 = vcmp.eq.s32.totalorder %v1756, %v22
    %vm1761 = vcmp.eq.s32.totalorder %v1756, %v23
    %vm1762 = vcmp.eq.s32.totalorder %v1756, %v24
    %vm1763 = vcmp.eq.s32.totalorder %v1756, %v25
    %vm1764 = vcmp.eq.s32.totalorder %v1756, %v26
    %v1765 = vsel %vm1757, 1, 0
    %v1766 = vsel %vm1758, 1, 0
    %v1767 = vsel %vm1759, 1, 0
    %v1768 = vsel %vm1760, 1, 0
    %v1769 = vsel %vm1761, 1, 0
    %v1770 = vsel %vm1762, 1, 0
    %v1771 = vsel %vm1763, 1, 0
    %v1772 = vsel %vm1764, 1, 0
    %v1773 = vcvt.s32.f32 %v1765
    %v1774 = vcvt.s32.f32 %v1766
    %v1775 = vcvt.s32.f32 %v1767
    %v1776 = vcvt.s32.f32 %v1768
    %v1777 = vcvt.s32.f32 %v1769
    %v1778 = vcvt.s32.f32 %v1770
    %v1779 = vcvt.s32.f32 %v1771
    %v1780 = vcvt.s32.f32 %v1772
    %v1781 = vadd.f32 %v1744, %v1773
    %v1782 = vadd.f32 %v1745, %v1774
    %v1783 = vadd.f32 %v1746, %v1775
    %v1784 = vadd.f32 %v1747, %v1776
    %v1785 = vadd.f32 %v1748, %v1777
    %v1786 = vadd.f32 %v1749, %v1778
    %v1787 = vadd.f32 %v1750, %v1779
    %v1788 = vadd.f32 %v1751, %v1780
    %v1789 = vld [vmem:[%s1 + $0x3] sm:$0x1]
    %v1790 = vlaneseq
    %v1791 = vshrl.u32 %v1790, 7
    %v1792 = vsub.s32 0, %v1791
    %v1793 = vrot.slane %v1789, %v1792
    %vm1794 = vcmp.eq.s32.totalorder %v1793, %v19
    %vm1795 = vcmp.eq.s32.totalorder %v1793, %v20
    %vm1796 = vcmp.eq.s32.totalorder %v1793, %v21
    %vm1797 = vcmp.eq.s32.totalorder %v1793, %v22
    %vm1798 = vcmp.eq.s32.totalorder %v1793, %v23
    %vm1799 = vcmp.eq.s32.totalorder %v1793, %v24
    %vm1800 = vcmp.eq.s32.totalorder %v1793, %v25
    %vm1801 = vcmp.eq.s32.totalorder %v1793, %v26
    %v1802 = vsel %vm1794, 1, 0
    %v1803 = vsel %vm1795, 1, 0
    %v1804 = vsel %vm1796, 1, 0
    %v1805 = vsel %vm1797, 1, 0
    %v1806 = vsel %vm1798, 1, 0
    %v1807 = vsel %vm1799, 1, 0
    %v1808 = vsel %vm1800, 1, 0
    %v1809 = vsel %vm1801, 1, 0
    %v1810 = vcvt.s32.f32 %v1802
    %v1811 = vcvt.s32.f32 %v1803
    %v1812 = vcvt.s32.f32 %v1804
    %v1813 = vcvt.s32.f32 %v1805
    %v1814 = vcvt.s32.f32 %v1806
    %v1815 = vcvt.s32.f32 %v1807
    %v1816 = vcvt.s32.f32 %v1808
    %v1817 = vcvt.s32.f32 %v1809
    %v1818 = vadd.f32 %v1781, %v1810
    %v1819 = vadd.f32 %v1782, %v1811
    %v1820 = vadd.f32 %v1783, %v1812
    %v1821 = vadd.f32 %v1784, %v1813
    %v1822 = vadd.f32 %v1785, %v1814
    %v1823 = vadd.f32 %v1786, %v1815
    %v1824 = vadd.f32 %v1787, %v1816
    %v1825 = vadd.f32 %v1788, %v1817
    %v1826 = vld [vmem:[%s1 + $0x4] sm:$0x1]
    %v1827 = vlaneseq
    %v1828 = vshrl.u32 %v1827, 7
    %v1829 = vsub.s32 0, %v1828
    %v1830 = vrot.slane %v1826, %v1829
    %vm1831 = vcmp.eq.s32.totalorder %v1830, %v19
    %vm1832 = vcmp.eq.s32.totalorder %v1830, %v20
    %vm1833 = vcmp.eq.s32.totalorder %v1830, %v21
    %vm1834 = vcmp.eq.s32.totalorder %v1830, %v22
    %vm1835 = vcmp.eq.s32.totalorder %v1830, %v23
    %vm1836 = vcmp.eq.s32.totalorder %v1830, %v24
    %vm1837 = vcmp.eq.s32.totalorder %v1830, %v25
    %vm1838 = vcmp.eq.s32.totalorder %v1830, %v26
    %v1839 = vsel %vm1831, 1, 0
    %v1840 = vsel %vm1832, 1, 0
    %v1841 = vsel %vm1833, 1, 0
    %v1842 = vsel %vm1834, 1, 0
    %v1843 = vsel %vm1835, 1, 0
    %v1844 = vsel %vm1836, 1, 0
    %v1845 = vsel %vm1837, 1, 0
    %v1846 = vsel %vm1838, 1, 0
    %v1847 = vcvt.s32.f32 %v1839
    %v1848 = vcvt.s32.f32 %v1840
    %v1849 = vcvt.s32.f32 %v1841
    %v1850 = vcvt.s32.f32 %v1842
    %v1851 = vcvt.s32.f32 %v1843
    %v1852 = vcvt.s32.f32 %v1844
    %v1853 = vcvt.s32.f32 %v1845
    %v1854 = vcvt.s32.f32 %v1846
    %v1855 = vadd.f32 %v1818, %v1847
    %v1856 = vadd.f32 %v1819, %v1848
    %v1857 = vadd.f32 %v1820, %v1849
    %v1858 = vadd.f32 %v1821, %v1850
    %v1859 = vadd.f32 %v1822, %v1851
    %v1860 = vadd.f32 %v1823, %v1852
    %v1861 = vadd.f32 %v1824, %v1853
    %v1862 = vadd.f32 %v1825, %v1854
    %v1863 = vld [vmem:[%s1 + $0x5] sm:$0x1]
    %v1864 = vlaneseq
    %v1865 = vshrl.u32 %v1864, 7
    %v1866 = vsub.s32 0, %v1865
    %v1867 = vrot.slane %v1863, %v1866
    %vm1868 = vcmp.eq.s32.totalorder %v1867, %v19
    %vm1869 = vcmp.eq.s32.totalorder %v1867, %v20
    %vm1870 = vcmp.eq.s32.totalorder %v1867, %v21
    %vm1871 = vcmp.eq.s32.totalorder %v1867, %v22
    %vm1872 = vcmp.eq.s32.totalorder %v1867, %v23
    %vm1873 = vcmp.eq.s32.totalorder %v1867, %v24
    %vm1874 = vcmp.eq.s32.totalorder %v1867, %v25
    %vm1875 = vcmp.eq.s32.totalorder %v1867, %v26
    %v1876 = vsel %vm1868, 1, 0
    %v1877 = vsel %vm1869, 1, 0
    %v1878 = vsel %vm1870, 1, 0
    %v1879 = vsel %vm1871, 1, 0
    %v1880 = vsel %vm1872, 1, 0
    %v1881 = vsel %vm1873, 1, 0
    %v1882 = vsel %vm1874, 1, 0
    %v1883 = vsel %vm1875, 1, 0
    %v1884 = vcvt.s32.f32 %v1876
    %v1885 = vcvt.s32.f32 %v1877
    %v1886 = vcvt.s32.f32 %v1878
    %v1887 = vcvt.s32.f32 %v1879
    %v1888 = vcvt.s32.f32 %v1880
    %v1889 = vcvt.s32.f32 %v1881
    %v1890 = vcvt.s32.f32 %v1882
    %v1891 = vcvt.s32.f32 %v1883
    %v1892 = vadd.f32 %v1855, %v1884
    %v1893 = vadd.f32 %v1856, %v1885
    %v1894 = vadd.f32 %v1857, %v1886
    %v1895 = vadd.f32 %v1858, %v1887
    %v1896 = vadd.f32 %v1859, %v1888
    %v1897 = vadd.f32 %v1860, %v1889
    %v1898 = vadd.f32 %v1861, %v1890
    %v1899 = vadd.f32 %v1862, %v1891
    %v1900 = vld [vmem:[%s1 + $0x6] sm:$0x1]
    %v1901 = vlaneseq
    %v1902 = vshrl.u32 %v1901, 7
    %v1903 = vsub.s32 0, %v1902
    %v1904 = vrot.slane %v1900, %v1903
    %vm1905 = vcmp.eq.s32.totalorder %v1904, %v19
    %vm1906 = vcmp.eq.s32.totalorder %v1904, %v20
    %vm1907 = vcmp.eq.s32.totalorder %v1904, %v21
    %vm1908 = vcmp.eq.s32.totalorder %v1904, %v22
    %vm1909 = vcmp.eq.s32.totalorder %v1904, %v23
    %vm1910 = vcmp.eq.s32.totalorder %v1904, %v24
    %vm1911 = vcmp.eq.s32.totalorder %v1904, %v25
    %vm1912 = vcmp.eq.s32.totalorder %v1904, %v26
    %v1913 = vsel %vm1905, 1, 0
    %v1914 = vsel %vm1906, 1, 0
    %v1915 = vsel %vm1907, 1, 0
    %v1916 = vsel %vm1908, 1, 0
    %v1917 = vsel %vm1909, 1, 0
    %v1918 = vsel %vm1910, 1, 0
    %v1919 = vsel %vm1911, 1, 0
    %v1920 = vsel %vm1912, 1, 0
    %v1921 = vcvt.s32.f32 %v1913
    %v1922 = vcvt.s32.f32 %v1914
    %v1923 = vcvt.s32.f32 %v1915
    %v1924 = vcvt.s32.f32 %v1916
    %v1925 = vcvt.s32.f32 %v1917
    %v1926 = vcvt.s32.f32 %v1918
    %v1927 = vcvt.s32.f32 %v1919
    %v1928 = vcvt.s32.f32 %v1920
    %v1929 = vadd.f32 %v1892, %v1921
    %v1930 = vadd.f32 %v1893, %v1922
    %v1931 = vadd.f32 %v1894, %v1923
    %v1932 = vadd.f32 %v1895, %v1924
    %v1933 = vadd.f32 %v1896, %v1925
    %v1934 = vadd.f32 %v1897, %v1926
    %v1935 = vadd.f32 %v1898, %v1927
    %v1936 = vadd.f32 %v1899, %v1928
    %v1937 = vld [vmem:[%s1 + $0x7] sm:$0x1]
    %v1938 = vlaneseq
    %v1939 = vshrl.u32 %v1938, 7
    %v1940 = vsub.s32 0, %v1939
    %v1941 = vrot.slane %v1937, %v1940
    %vm1942 = vcmp.eq.s32.totalorder %v1941, %v19
    %vm1943 = vcmp.eq.s32.totalorder %v1941, %v20
    %vm1944 = vcmp.eq.s32.totalorder %v1941, %v21
    %vm1945 = vcmp.eq.s32.totalorder %v1941, %v22
    %vm1946 = vcmp.eq.s32.totalorder %v1941, %v23
    %vm1947 = vcmp.eq.s32.totalorder %v1941, %v24
    %vm1948 = vcmp.eq.s32.totalorder %v1941, %v25
    %vm1949 = vcmp.eq.s32.totalorder %v1941, %v26
    %v1950 = vsel %vm1942, 1, 0
    %v1951 = vsel %vm1943, 1, 0
    %v1952 = vsel %vm1944, 1, 0
    %v1953 = vsel %vm1945, 1, 0
    %v1954 = vsel %vm1946, 1, 0
    %v1955 = vsel %vm1947, 1, 0
    %v1956 = vsel %vm1948, 1, 0
    %v1957 = vsel %vm1949, 1, 0
    %v1958 = vcvt.s32.f32 %v1950
    %v1959 = vcvt.s32.f32 %v1951
    %v1960 = vcvt.s32.f32 %v1952
    %v1961 = vcvt.s32.f32 %v1953
    %v1962 = vcvt.s32.f32 %v1954
    %v1963 = vcvt.s32.f32 %v1955
    %v1964 = vcvt.s32.f32 %v1956
    %v1965 = vcvt.s32.f32 %v1957
    %v1966 = vadd.f32 %v1929, %v1958
    %v1967 = vadd.f32 %v1930, %v1959
    %v1968 = vadd.f32 %v1931, %v1960
    %v1969 = vadd.f32 %v1932, %v1961
    %v1970 = vadd.f32 %v1933, %v1962
    %v1971 = vadd.f32 %v1934, %v1963
    %v1972 = vadd.f32 %v1935, %v1964
    %v1973 = vadd.f32 %v1936, %v1965
    %v1974 = vld [vmem:[%s1 + $0x8] sm:$0x1]
    %v1975 = vlaneseq
    %v1976 = vshrl.u32 %v1975, 7
    %v1977 = vsub.s32 0, %v1976
    %v1978 = vrot.slane %v1974, %v1977
    %vm1979 = vcmp.eq.s32.totalorder %v1978, %v19
    %vm1980 = vcmp.eq.s32.totalorder %v1978, %v20
    %vm1981 = vcmp.eq.s32.totalorder %v1978, %v21
    %vm1982 = vcmp.eq.s32.totalorder %v1978, %v22
    %vm1983 = vcmp.eq.s32.totalorder %v1978, %v23
    %vm1984 = vcmp.eq.s32.totalorder %v1978, %v24
    %vm1985 = vcmp.eq.s32.totalorder %v1978, %v25
    %vm1986 = vcmp.eq.s32.totalorder %v1978, %v26
    %v1987 = vsel %vm1979, 1, 0
    %v1988 = vsel %vm1980, 1, 0
    %v1989 = vsel %vm1981, 1, 0
    %v1990 = vsel %vm1982, 1, 0
    %v1991 = vsel %vm1983, 1, 0
    %v1992 = vsel %vm1984, 1, 0
    %v1993 = vsel %vm1985, 1, 0
    %v1994 = vsel %vm1986, 1, 0
    %v1995 = vcvt.s32.f32 %v1987
    %v1996 = vcvt.s32.f32 %v1988
    %v1997 = vcvt.s32.f32 %v1989
    %v1998 = vcvt.s32.f32 %v1990
    %v1999 = vcvt.s32.f32 %v1991
    %v2000 = vcvt.s32.f32 %v1992
    %v2001 = vcvt.s32.f32 %v1993
    %v2002 = vcvt.s32.f32 %v1994
    %v2003 = vadd.f32 %v1966, %v1995
    %v2004 = vadd.f32 %v1967, %v1996
    %v2005 = vadd.f32 %v1968, %v1997
    %v2006 = vadd.f32 %v1969, %v1998
    %v2007 = vadd.f32 %v1970, %v1999
    %v2008 = vadd.f32 %v1971, %v2000
    %v2009 = vadd.f32 %v1972, %v2001
    %v2010 = vadd.f32 %v1973, %v2002
    %v2011 = vld [vmem:[%s1 + $0x9] sm:$0x1]
    %v2012 = vlaneseq
    %v2013 = vshrl.u32 %v2012, 7
    %v2014 = vsub.s32 0, %v2013
    %v2015 = vrot.slane %v2011, %v2014
    %vm2016 = vcmp.eq.s32.totalorder %v2015, %v19
    %vm2017 = vcmp.eq.s32.totalorder %v2015, %v20
    %vm2018 = vcmp.eq.s32.totalorder %v2015, %v21
    %vm2019 = vcmp.eq.s32.totalorder %v2015, %v22
    %vm2020 = vcmp.eq.s32.totalorder %v2015, %v23
    %vm2021 = vcmp.eq.s32.totalorder %v2015, %v24
    %vm2022 = vcmp.eq.s32.totalorder %v2015, %v25
    %vm2023 = vcmp.eq.s32.totalorder %v2015, %v26
    %v2024 = vsel %vm2016, 1, 0
    %v2025 = vsel %vm2017, 1, 0
    %v2026 = vsel %vm2018, 1, 0
    %v2027 = vsel %vm2019, 1, 0
    %v2028 = vsel %vm2020, 1, 0
    %v2029 = vsel %vm2021, 1, 0
    %v2030 = vsel %vm2022, 1, 0
    %v2031 = vsel %vm2023, 1, 0
    %v2032 = vcvt.s32.f32 %v2024
    %v2033 = vcvt.s32.f32 %v2025
    %v2034 = vcvt.s32.f32 %v2026
    %v2035 = vcvt.s32.f32 %v2027
    %v2036 = vcvt.s32.f32 %v2028
    %v2037 = vcvt.s32.f32 %v2029
    %v2038 = vcvt.s32.f32 %v2030
    %v2039 = vcvt.s32.f32 %v2031
    %v2040 = vadd.f32 %v2003, %v2032
    %v2041 = vadd.f32 %v2004, %v2033
    %v2042 = vadd.f32 %v2005, %v2034
    %v2043 = vadd.f32 %v2006, %v2035
    %v2044 = vadd.f32 %v2007, %v2036
    %v2045 = vadd.f32 %v2008, %v2037
    %v2046 = vadd.f32 %v2009, %v2038
    %v2047 = vadd.f32 %v2010, %v2039
    %v2048 = vld [vmem:[%s1 + $0xa] sm:$0x1]
    %v2049 = vlaneseq
    %v2050 = vshrl.u32 %v2049, 7
    %v2051 = vsub.s32 0, %v2050
    %v2052 = vrot.slane %v2048, %v2051
    %vm2053 = vcmp.eq.s32.totalorder %v2052, %v19
    %vm2054 = vcmp.eq.s32.totalorder %v2052, %v20
    %vm2055 = vcmp.eq.s32.totalorder %v2052, %v21
    %vm2056 = vcmp.eq.s32.totalorder %v2052, %v22
    %vm2057 = vcmp.eq.s32.totalorder %v2052, %v23
    %vm2058 = vcmp.eq.s32.totalorder %v2052, %v24
    %vm2059 = vcmp.eq.s32.totalorder %v2052, %v25
    %vm2060 = vcmp.eq.s32.totalorder %v2052, %v26
    %v2061 = vsel %vm2053, 1, 0
    %v2062 = vsel %vm2054, 1, 0
    %v2063 = vsel %vm2055, 1, 0
    %v2064 = vsel %vm2056, 1, 0
    %v2065 = vsel %vm2057, 1, 0
    %v2066 = vsel %vm2058, 1, 0
    %v2067 = vsel %vm2059, 1, 0
    %v2068 = vsel %vm2060, 1, 0
    %v2069 = vcvt.s32.f32 %v2061
    %v2070 = vcvt.s32.f32 %v2062
    %v2071 = vcvt.s32.f32 %v2063
    %v2072 = vcvt.s32.f32 %v2064
    %v2073 = vcvt.s32.f32 %v2065
    %v2074 = vcvt.s32.f32 %v2066
    %v2075 = vcvt.s32.f32 %v2067
    %v2076 = vcvt.s32.f32 %v2068
    %v2077 = vadd.f32 %v2040, %v2069
    %v2078 = vadd.f32 %v2041, %v2070
    %v2079 = vadd.f32 %v2042, %v2071
    %v2080 = vadd.f32 %v2043, %v2072
    %v2081 = vadd.f32 %v2044, %v2073
    %v2082 = vadd.f32 %v2045, %v2074
    %v2083 = vadd.f32 %v2046, %v2075
    %v2084 = vadd.f32 %v2047, %v2076
    %v2085 = vld [vmem:[%s1 + $0xb] sm:$0x1]
    %v2086 = vlaneseq
    %v2087 = vshrl.u32 %v2086, 7
    %v2088 = vsub.s32 0, %v2087
    %v2089 = vrot.slane %v2085, %v2088
    %vm2090 = vcmp.eq.s32.totalorder %v2089, %v19
    %vm2091 = vcmp.eq.s32.totalorder %v2089, %v20
    %vm2092 = vcmp.eq.s32.totalorder %v2089, %v21
    %vm2093 = vcmp.eq.s32.totalorder %v2089, %v22
    %vm2094 = vcmp.eq.s32.totalorder %v2089, %v23
    %vm2095 = vcmp.eq.s32.totalorder %v2089, %v24
    %vm2096 = vcmp.eq.s32.totalorder %v2089, %v25
    %vm2097 = vcmp.eq.s32.totalorder %v2089, %v26
    %v2098 = vsel %vm2090, 1, 0
    %v2099 = vsel %vm2091, 1, 0
    %v2100 = vsel %vm2092, 1, 0
    %v2101 = vsel %vm2093, 1, 0
    %v2102 = vsel %vm2094, 1, 0
    %v2103 = vsel %vm2095, 1, 0
    %v2104 = vsel %vm2096, 1, 0
    %v2105 = vsel %vm2097, 1, 0
    %v2106 = vcvt.s32.f32 %v2098
    %v2107 = vcvt.s32.f32 %v2099
    %v2108 = vcvt.s32.f32 %v2100
    %v2109 = vcvt.s32.f32 %v2101
    %v2110 = vcvt.s32.f32 %v2102
    %v2111 = vcvt.s32.f32 %v2103
    %v2112 = vcvt.s32.f32 %v2104
    %v2113 = vcvt.s32.f32 %v2105
    %v2114 = vadd.f32 %v2077, %v2106
    %v2115 = vadd.f32 %v2078, %v2107
    %v2116 = vadd.f32 %v2079, %v2108
    %v2117 = vadd.f32 %v2080, %v2109
    %v2118 = vadd.f32 %v2081, %v2110
    %v2119 = vadd.f32 %v2082, %v2111
    %v2120 = vadd.f32 %v2083, %v2112
    %v2121 = vadd.f32 %v2084, %v2113
    %v2122 = vmul.f32 %v2114, %v1670
    %v2123 = vmul.f32 %v2115, %v1671
    %v2124 = vmul.f32 %v2116, %v1672
    %v2125 = vmul.f32 %v2117, %v1673
    %v2126 = vmul.f32 %v2118, %v1674
    %v2127 = vmul.f32 %v2119, %v1675
    %v2128 = vmul.f32 %v2120, %v1676
    %v2129 = vmul.f32 %v2121, %v1677
    %vm2130 = vcmask 15360
    %v2131 = vsel %vm2130, %v2122, 0.0
    %v2132 = vsel %vm2130, %v2123, 0.0
    %v2133 = vadd.f32 %v2131, %v2132
    %v2134 = vsel %vm2130, %v2124, 0.0
    %v2135 = vadd.f32 %v2133, %v2134
    %v2136 = vsel %vm2130, %v2125, 0.0
    %v2137 = vadd.f32 %v2135, %v2136
    %v2138 = vsel %vm2130, %v2126, 0.0
    %v2139 = vadd.f32 %v2137, %v2138
    %v2140 = vsel %vm2130, %v2127, 0.0
    %v2141 = vadd.f32 %v2139, %v2140
    %v2142 = vsel %vm2130, %v2128, 0.0
    %v2143 = vadd.f32 %v2141, %v2142
    %v2144 = vsel %vm2130, %v2129, 0.0
    %v2145 = vadd.f32 %v2143, %v2144
    %v2146 = vrot.slane %v2145, 4
    %v2147 = vadd.f32 %v2145, %v2146
    %v2148 = vrot.slane %v2147, 2
    %v2149 = vadd.f32 %v2147, %v2148
    %v2150 = vrot.slane %v2149, 1
    %v2151 = vadd.f32 %v2149, %v2150
    %v2152 = vsub.f32 0.0, %v2151
    %vm2153 = vcmask 8192
    %2154 = vst.msk [vmem:[#allocation2] sm:$0x1] %vm2153, %v2152
    // Predicated region
    $region18: #{tpu_custom_call.1} parent=1 // pred_check
      _
    $region19: #{tpu_custom_call.1} parent=1 // pred_check_branch
      %2156 = sbr.rel (0) target = $region21
    $region20: #{tpu_custom_call.1} parent=1 // pred_region
      %s2158 = ssub.s32 16, 16
      %2159 = vsyncadd [#allocation3], %s2158
      %s2161 = sshll.u32 [#allocation2], 4
      %s2162 = int_to_ptr.vmem [resolvable:$true] %s2161
      %2164 = dma.vmem_to_hbm [thread:$0]  %s2162, 16, %s4, [#allocation3]
    $region21: #{tpu_custom_call.1} parent=1 // pred_fallthru
      _
    // Predicated region
    $region22: #{tpu_custom_call.1} parent=1 // pred_check
      _
    $region23: #{tpu_custom_call.1} parent=1 // pred_check_branch
      %2166 = sbr.rel (0) target = $region25
    $region24: #{tpu_custom_call.1} parent=1 // pred_region
      %2167 = dma.done [#allocation3], 16
    $region25: #{tpu_custom_call.1} parent=1 // pred_fallthru
      _
    %2168 = vsyncpa [#allocation3], 1

</llo_original>
